<compile_context>
chip_gen: v7x
topology: tpu7x:2x2x1
jax: 0.10.0
libtpu: 0.0.40
codegen_flags: <defaults>
</compile_context>

<pallas_src>
import functools

import jax
import jax.numpy as jnp
from jax.experimental import pallas as pl
from jax.experimental.pallas import tpu as pltpu

KSIZE = 7
PAD = KSIZE // 2  # 3


def _spatial_gate_kernel(x_ref, w_ref, shift_ref, o_ref, *, TB, C, H, W):
    """x_ref/o_ref: (TB, C, H*W) lane-dense; w_ref: (98,) SMEM; shift_ref: (1,) SMEM."""
    HW = H * W
    x = x_ref[...].astype(jnp.float32)                    # (TB, C, HW)

    # --- channel pooling: reduction over the sublane (C) axis, lane-dense ---
    max_p = jnp.max(x, axis=1)                            # (TB, HW)
    avg_p = jnp.sum(x, axis=1) * (1.0 / float(C))         # (TB, HW)
    pooled = jnp.concatenate(
        [max_p[:, None, :], avg_p[:, None, :]], axis=1)   # (TB, 2, HW)

    # Only the tiny pooled maps change layout for the conv.
    pooled2d = pooled.reshape(TB, 2, H, W)                # (TB, 2, H, W)

    # --- zero padding (pad=3), done once for both pooled channels ---
    zrow = jnp.zeros((TB, 2, PAD, W), jnp.float32)
    pv = jnp.concatenate([zrow, pooled2d, zrow], axis=2)          # (TB,2,H+6,W)
    zcol = jnp.zeros((TB, 2, H + 2 * PAD, PAD), jnp.float32)
    padded = jnp.concatenate([zcol, pv, zcol], axis=3)            # (TB,2,H+6,W+6)

    # --- 7x7 conv, 2 -> 1 channels, BN folded (bias in the accumulator init).
    # Lane (W-direction) shifts hoisted out of the kh loop: 7 lane slices
    # total, shared by both channels; inner loops are sublane-only slices.
    acc = jnp.full((TB, H, W), shift_ref[0], dtype=jnp.float32)
    for kw in range(KSIZE):
        p_kw = padded[:, :, :, kw:kw + W]                          # (TB,2,H+6,W)
        for c in range(2):
            pc = p_kw[:, c]                                        # (TB,H+6,W)
            for kh in range(KSIZE):
                wgt = w_ref[c * KSIZE * KSIZE + kh * KSIZE + kw]
                acc = acc + wgt * pc[:, kh:kh + H, :]

    # --- sigmoid gate (exp on EUP) + lane-dense rescale/store ---
    scale = 1.0 / (1.0 + jnp.exp(-acc))                            # (TB, H, W)
    scale_flat = scale.reshape(TB, 1, HW)                          # lane-dense
    o_ref[...] = (x * scale_flat).astype(o_ref.dtype)


def _choose_batch_tile(N, per_image_bytes, target_bytes=1 << 20):
    """Largest divisor of N with block <= ~1 MiB and >=2 grid steps when N>=2."""
    cap = max(1, target_bytes // max(int(per_image_bytes), 1))
    if N >= 2:
        cap = min(cap, N // 2)      # keep >=2 parallel grid steps (v7x has 2 TCs)
    cap = int(max(1, min(cap, N)))
    for tb in range(cap, 0, -1):
        if N % tb == 0:
            return tb
    return 1


def spatial_gate_forward(x, conv_w, bn_gamma, bn_beta, bn_mean, bn_var,
                         eps=1e-5):
    """x: (N, C, H, W).  conv_w: (1, 2, 7, 7).  BN params: shape (1,)."""
    N, C, H, W = x.shape
    HW = H * W
    out_dtype = x.dtype  # keep HBM I/O in the input dtype (bf16 stays bf16)

    # Fold eval-mode BatchNorm into the conv weight + a scalar shift.
    s = bn_gamma.astype(jnp.float32) / jnp.sqrt(bn_var.astype(jnp.float32) + eps)
    w_folded = (conv_w.astype(jnp.float32) * s[:, None, None, None]).reshape(-1)
    shift = (bn_beta.astype(jnp.float32)
             - bn_mean.astype(jnp.float32) * s).reshape(1)

    x_flat = x.reshape(N, C, HW)          # free: row-major contiguous

    TB = _choose_batch_tile(N, C * HW * x.dtype.itemsize)
    kernel = functools.partial(_spatial_gate_kernel, TB=TB, C=C, H=H, W=W)

    out_flat = pl.pallas_call(
        kernel,
        out_shape=jax.ShapeDtypeStruct((N, C, HW), out_dtype),
        grid=(N // TB,),
        in_specs=[
            pl.BlockSpec((TB, C, HW), lambda b: (b, 0, 0)),
            pl.BlockSpec(memory_space=pltpu.MemorySpace.SMEM),
            pl.BlockSpec(memory_space=pltpu.MemorySpace.SMEM),
        ],
        out_specs=pl.BlockSpec((TB, C, HW), lambda b: (b, 0, 0)),
        compiler_params=pltpu.CompilerParams(
            dimension_semantics=("parallel",)),
    )(x_flat, w_folded, shift)

    return out_flat.reshape(N, C, H, W)


def spatial_gate_reference(x, conv_w, bn_gamma, bn_beta, bn_mean, bn_var,
                           eps=1e-5):
    """Pure-JAX reference mirroring the PyTorch forward (BN in eval mode)."""
    xf = x.astype(jnp.float32)
    mx = jnp.max(xf, axis=1, keepdims=True)
    av = jnp.mean(xf, axis=1, keepdims=True)
    comp = jnp.concatenate([mx, av], axis=1)                       # (N,2,H,W)
    conv = jax.lax.conv_general_dilated(
        comp, conv_w.astype(jnp.float32), window_strides=(1, 1),
        padding=[(PAD, PAD), (PAD, PAD)],
        dimension_numbers=("NCHW", "OIHW", "NCHW"))                # (N,1,H,W)
    g = bn_gamma[None, :, None, None]
    b = bn_beta[None, :, None, None]
    m = bn_mean[None, :, None, None]
    v = bn_var[None, :, None, None]
    bn = (conv - m) / jnp.sqrt(v + eps) * g + b
    scale = jax.nn.sigmoid(bn)
    return (xf * scale).astype(x.dtype)


if __name__ == "__main__":
    key = jax.random.PRNGKey(0)
    k_x, k_w = jax.random.split(key)

    N, C, H, W = 2, 4, 16, 16
    x = jax.random.normal(k_x, (N, C, H, W), dtype=jnp.float32)

    # Conv2d(2, 1, kernel_size=7, padding=3, bias=False) weight,
    # deterministic kaiming-uniform-like init: bound = 1/sqrt(fan_in).
    fan_in = 2 * KSIZE * KSIZE
    bound = 1.0 / jnp.sqrt(jnp.float32(fan_in))
    conv_w = jax.random.uniform(k_w, (1, 2, KSIZE, KSIZE),
                                minval=-bound, maxval=bound,
                                dtype=jnp.float32)

    # BatchNorm2d(1) default parameters (eval mode).
    bn_gamma = jnp.ones((1,), jnp.float32)
    bn_beta = jnp.zeros((1,), jnp.float32)
    bn_mean = jnp.zeros((1,), jnp.float32)
    bn_var = jnp.ones((1,), jnp.float32)

    out = spatial_gate_forward(x, conv_w, bn_gamma, bn_beta, bn_mean, bn_var)
    out = jax.block_until_ready(out)

    ref = spatial_gate_reference(x, conv_w, bn_gamma, bn_beta, bn_mean, bn_var)
    ref = jax.block_until_ready(ref)

    assert out.shape == (N, C, H, W)
    assert jnp.allclose(out, ref, rtol=1e-4, atol=1e-4), (
        f"max abs err = {jnp.max(jnp.abs(out - ref))}")

    print("KERNEL_OK")
</pallas_src>

<mosaic_0001>
module attributes {stable_mosaic.version = 11 : i64} {
  func.func @_spatial_gate_kernel(%arg0: i32, %arg1: memref<1x4x256xf32, #tpu.memory_space<vmem>>, %arg2: memref<98xf32, #tpu.memory_space<smem>>, %arg3: memref<1xf32, #tpu.memory_space<smem>>, %arg4: memref<1x4x256xf32, #tpu.memory_space<vmem>>) attributes {dimension_semantics = [#tpu.dimension_semantics<parallel>], iteration_bounds = array<i64: 2>, scalar_prefetch = 0 : i64, scratch_operands = 0 : i64, tpu.core_type = #tpu.core_type<tc>, window_params = [{transform_indices = @transform_0, window_bounds = array<i64: 1, 4, 256>}, {transform_indices = @transform_1, window_bounds = array<i64: 98>}, {transform_indices = @transform_2, window_bounds = array<i64: 1>}, {transform_indices = @transform_3, window_bounds = array<i64: 1, 4, 256>}]} {
    %c0 = arith.constant 0 : index
    %c0_0 = arith.constant 0 : index
    %c0_1 = arith.constant 0 : index
    %0 = vector.load %arg1[%c0, %c0_0, %c0_1] : memref<1x4x256xf32, #tpu.memory_space<vmem>>, vector<1x4x256xf32>
    %cst = arith.constant dense<0xFF800000> : vector<1x256xf32>
    %1 = vector.multi_reduction <maximumf>, %0, %cst [1] : vector<1x4x256xf32> to vector<1x256xf32>
    %cst_2 = arith.constant dense<0.000000e+00> : vector<1x256xf32>
    %2 = vector.multi_reduction <add>, %0, %cst_2 [1] : vector<1x4x256xf32> to vector<1x256xf32>
    %cst_3 = arith.constant 2.500000e-01 : f32
    %3 = vector.broadcast %cst_3 : f32 to vector<1x256xf32>
    %4 = arith.mulf %2, %3 : vector<1x256xf32>
    %5 = vector.shape_cast %1 : vector<1x256xf32> to vector<1x1x256xf32>
    %6 = vector.shape_cast %4 : vector<1x256xf32> to vector<1x1x256xf32>
    %7 = tpu.concatenate %5, %6 in 1 : vector<1x1x256xf32>, vector<1x1x256xf32> -> vector<1x2x256xf32>
    %8 = vector.shape_cast %7 : vector<1x2x256xf32> to vector<1x2x16x16xf32>
    %cst_4 = arith.constant 0.000000e+00 : f32
    %9 = vector.broadcast %cst_4 : f32 to vector<1x2x3x16xf32>
    %10 = tpu.concatenate %9, %8, %9 in 2 : vector<1x2x3x16xf32>, vector<1x2x16x16xf32>, vector<1x2x3x16xf32> -> vector<1x2x22x16xf32>
    %cst_5 = arith.constant 0.000000e+00 : f32
    %11 = vector.broadcast %cst_5 : f32 to vector<1x2x22x3xf32>
    %12 = tpu.concatenate %11, %10, %11 in 3 : vector<1x2x22x3xf32>, vector<1x2x22x16xf32>, vector<1x2x22x3xf32> -> vector<1x2x22x22xf32>
    %c0_6 = arith.constant 0 : index
    %13 = memref.load %arg3[%c0_6] : memref<1xf32, #tpu.memory_space<smem>>
    %14 = vector.broadcast %13 : f32 to vector<1x16x16xf32>
    %15 = vector.extract_strided_slice %12 {offsets = [0, 0, 0, 0], sizes = [1, 2, 22, 16], strides = [1, 1, 1, 1]} : vector<1x2x22x22xf32> to vector<1x2x22x16xf32>
    %16 = vector.extract_strided_slice %15 {offsets = [0, 0, 0, 0], sizes = [1, 1, 22, 16], strides = [1, 1, 1, 1]} : vector<1x2x22x16xf32> to vector<1x1x22x16xf32>
    %17 = vector.shape_cast %16 : vector<1x1x22x16xf32> to vector<1x22x16xf32>
    %c0_7 = arith.constant 0 : index
    %18 = memref.load %arg2[%c0_7] : memref<98xf32, #tpu.memory_space<smem>>
    %19 = vector.extract_strided_slice %17 {offsets = [0, 0, 0], sizes = [1, 16, 16], strides = [1, 1, 1]} : vector<1x22x16xf32> to vector<1x16x16xf32>
    %20 = vector.broadcast %18 : f32 to vector<1x16x16xf32>
    %21 = arith.mulf %20, %19 : vector<1x16x16xf32>
    %22 = arith.addf %14, %21 : vector<1x16x16xf32>
    %c7 = arith.constant 7 : index
    %23 = memref.load %arg2[%c7] : memref<98xf32, #tpu.memory_space<smem>>
    %24 = vector.extract_strided_slice %17 {offsets = [0, 1, 0], sizes = [1, 16, 16], strides = [1, 1, 1]} : vector<1x22x16xf32> to vector<1x16x16xf32>
    %25 = vector.broadcast %23 : f32 to vector<1x16x16xf32>
    %26 = arith.mulf %25, %24 : vector<1x16x16xf32>
    %27 = arith.addf %22, %26 : vector<1x16x16xf32>
    %c14 = arith.constant 14 : index
    %28 = memref.load %arg2[%c14] : memref<98xf32, #tpu.memory_space<smem>>
    %29 = vector.extract_strided_slice %17 {offsets = [0, 2, 0], sizes = [1, 16, 16], strides = [1, 1, 1]} : vector<1x22x16xf32> to vector<1x16x16xf32>
    %30 = vector.broadcast %28 : f32 to vector<1x16x16xf32>
    %31 = arith.mulf %30, %29 : vector<1x16x16xf32>
    %32 = arith.addf %27, %31 : vector<1x16x16xf32>
    %c21 = arith.constant 21 : index
    %33 = memref.load %arg2[%c21] : memref<98xf32, #tpu.memory_space<smem>>
    %34 = vector.extract_strided_slice %17 {offsets = [0, 3, 0], sizes = [1, 16, 16], strides = [1, 1, 1]} : vector<1x22x16xf32> to vector<1x16x16xf32>
    %35 = vector.broadcast %33 : f32 to vector<1x16x16xf32>
    %36 = arith.mulf %35, %34 : vector<1x16x16xf32>
    %37 = arith.addf %32, %36 : vector<1x16x16xf32>
    %c28 = arith.constant 28 : index
    %38 = memref.load %arg2[%c28] : memref<98xf32, #tpu.memory_space<smem>>
    %39 = vector.extract_strided_slice %17 {offsets = [0, 4, 0], sizes = [1, 16, 16], strides = [1, 1, 1]} : vector<1x22x16xf32> to vector<1x16x16xf32>
    %40 = vector.broadcast %38 : f32 to vector<1x16x16xf32>
    %41 = arith.mulf %40, %39 : vector<1x16x16xf32>
    %42 = arith.addf %37, %41 : vector<1x16x16xf32>
    %c35 = arith.constant 35 : index
    %43 = memref.load %arg2[%c35] : memref<98xf32, #tpu.memory_space<smem>>
    %44 = vector.extract_strided_slice %17 {offsets = [0, 5, 0], sizes = [1, 16, 16], strides = [1, 1, 1]} : vector<1x22x16xf32> to vector<1x16x16xf32>
    %45 = vector.broadcast %43 : f32 to vector<1x16x16xf32>
    %46 = arith.mulf %45, %44 : vector<1x16x16xf32>
    %47 = arith.addf %42, %46 : vector<1x16x16xf32>
    %c42 = arith.constant 42 : index
    %48 = memref.load %arg2[%c42] : memref<98xf32, #tpu.memory_space<smem>>
    %49 = vector.extract_strided_slice %17 {offsets = [0, 6, 0], sizes = [1, 16, 16], strides = [1, 1, 1]} : vector<1x22x16xf32> to vector<1x16x16xf32>
    %50 = vector.broadcast %48 : f32 to vector<1x16x16xf32>
    %51 = arith.mulf %50, %49 : vector<1x16x16xf32>
    %52 = arith.addf %47, %51 : vector<1x16x16xf32>
    %53 = vector.extract_strided_slice %15 {offsets = [0, 1, 0, 0], sizes = [1, 1, 22, 16], strides = [1, 1, 1, 1]} : vector<1x2x22x16xf32> to vector<1x1x22x16xf32>
    %54 = vector.shape_cast %53 : vector<1x1x22x16xf32> to vector<1x22x16xf32>
    %c49 = arith.constant 49 : index
    %55 = memref.load %arg2[%c49] : memref<98xf32, #tpu.memory_space<smem>>
    %56 = vector.extract_strided_slice %54 {offsets = [0, 0, 0], sizes = [1, 16, 16], strides = [1, 1, 1]} : vector<1x22x16xf32> to vector<1x16x16xf32>
    %57 = vector.broadcast %55 : f32 to vector<1x16x16xf32>
    %58 = arith.mulf %57, %56 : vector<1x16x16xf32>
    %59 = arith.addf %52, %58 : vector<1x16x16xf32>
    %c56 = arith.constant 56 : index
    %60 = memref.load %arg2[%c56] : memref<98xf32, #tpu.memory_space<smem>>
    %61 = vector.extract_strided_slice %54 {offsets = [0, 1, 0], sizes = [1, 16, 16], strides = [1, 1, 1]} : vector<1x22x16xf32> to vector<1x16x16xf32>
    %62 = vector.broadcast %60 : f32 to vector<1x16x16xf32>
    %63 = arith.mulf %62, %61 : vector<1x16x16xf32>
    %64 = arith.addf %59, %63 : vector<1x16x16xf32>
    %c63 = arith.constant 63 : index
    %65 = memref.load %arg2[%c63] : memref<98xf32, #tpu.memory_space<smem>>
    %66 = vector.extract_strided_slice %54 {offsets = [0, 2, 0], sizes = [1, 16, 16], strides = [1, 1, 1]} : vector<1x22x16xf32> to vector<1x16x16xf32>
    %67 = vector.broadcast %65 : f32 to vector<1x16x16xf32>
    %68 = arith.mulf %67, %66 : vector<1x16x16xf32>
    %69 = arith.addf %64, %68 : vector<1x16x16xf32>
    %c70 = arith.constant 70 : index
    %70 = memref.load %arg2[%c70] : memref<98xf32, #tpu.memory_space<smem>>
    %71 = vector.extract_strided_slice %54 {offsets = [0, 3, 0], sizes = [1, 16, 16], strides = [1, 1, 1]} : vector<1x22x16xf32> to vector<1x16x16xf32>
    %72 = vector.broadcast %70 : f32 to vector<1x16x16xf32>
    %73 = arith.mulf %72, %71 : vector<1x16x16xf32>
    %74 = arith.addf %69, %73 : vector<1x16x16xf32>
    %c77 = arith.constant 77 : index
    %75 = memref.load %arg2[%c77] : memref<98xf32, #tpu.memory_space<smem>>
    %76 = vector.extract_strided_slice %54 {offsets = [0, 4, 0], sizes = [1, 16, 16], strides = [1, 1, 1]} : vector<1x22x16xf32> to vector<1x16x16xf32>
    %77 = vector.broadcast %75 : f32 to vector<1x16x16xf32>
    %78 = arith.mulf %77, %76 : vector<1x16x16xf32>
    %79 = arith.addf %74, %78 : vector<1x16x16xf32>
    %c84 = arith.constant 84 : index
    %80 = memref.load %arg2[%c84] : memref<98xf32, #tpu.memory_space<smem>>
    %81 = vector.extract_strided_slice %54 {offsets = [0, 5, 0], sizes = [1, 16, 16], strides = [1, 1, 1]} : vector<1x22x16xf32> to vector<1x16x16xf32>
    %82 = vector.broadcast %80 : f32 to vector<1x16x16xf32>
    %83 = arith.mulf %82, %81 : vector<1x16x16xf32>
    %84 = arith.addf %79, %83 : vector<1x16x16xf32>
    %c91 = arith.constant 91 : index
    %85 = memref.load %arg2[%c91] : memref<98xf32, #tpu.memory_space<smem>>
    %86 = vector.extract_strided_slice %54 {offsets = [0, 6, 0], sizes = [1, 16, 16], strides = [1, 1, 1]} : vector<1x22x16xf32> to vector<1x16x16xf32>
    %87 = vector.broadcast %85 : f32 to vector<1x16x16xf32>
    %88 = arith.mulf %87, %86 : vector<1x16x16xf32>
    %89 = arith.addf %84, %88 : vector<1x16x16xf32>
    %90 = vector.extract_strided_slice %12 {offsets = [0, 0, 0, 1], sizes = [1, 2, 22, 16], strides = [1, 1, 1, 1]} : vector<1x2x22x22xf32> to vector<1x2x22x16xf32>
    %91 = vector.extract_strided_slice %90 {offsets = [0, 0, 0, 0], sizes = [1, 1, 22, 16], strides = [1, 1, 1, 1]} : vector<1x2x22x16xf32> to vector<1x1x22x16xf32>
    %92 = vector.shape_cast %91 : vector<1x1x22x16xf32> to vector<1x22x16xf32>
    %c1 = arith.constant 1 : index
    %93 = memref.load %arg2[%c1] : memref<98xf32, #tpu.memory_space<smem>>
    %94 = vector.extract_strided_slice %92 {offsets = [0, 0, 0], sizes = [1, 16, 16], strides = [1, 1, 1]} : vector<1x22x16xf32> to vector<1x16x16xf32>
    %95 = vector.broadcast %93 : f32 to vector<1x16x16xf32>
    %96 = arith.mulf %95, %94 : vector<1x16x16xf32>
    %97 = arith.addf %89, %96 : vector<1x16x16xf32>
    %c8 = arith.constant 8 : index
    %98 = memref.load %arg2[%c8] : memref<98xf32, #tpu.memory_space<smem>>
    %99 = vector.extract_strided_slice %92 {offsets = [0, 1, 0], sizes = [1, 16, 16], strides = [1, 1, 1]} : vector<1x22x16xf32> to vector<1x16x16xf32>
    %100 = vector.broadcast %98 : f32 to vector<1x16x16xf32>
    %101 = arith.mulf %100, %99 : vector<1x16x16xf32>
    %102 = arith.addf %97, %101 : vector<1x16x16xf32>
    %c15 = arith.constant 15 : index
    %103 = memref.load %arg2[%c15] : memref<98xf32, #tpu.memory_space<smem>>
    %104 = vector.extract_strided_slice %92 {offsets = [0, 2, 0], sizes = [1, 16, 16], strides = [1, 1, 1]} : vector<1x22x16xf32> to vector<1x16x16xf32>
    %105 = vector.broadcast %103 : f32 to vector<1x16x16xf32>
    %106 = arith.mulf %105, %104 : vector<1x16x16xf32>
    %107 = arith.addf %102, %106 : vector<1x16x16xf32>
    %c22 = arith.constant 22 : index
    %108 = memref.load %arg2[%c22] : memref<98xf32, #tpu.memory_space<smem>>
    %109 = vector.extract_strided_slice %92 {offsets = [0, 3, 0], sizes = [1, 16, 16], strides = [1, 1, 1]} : vector<1x22x16xf32> to vector<1x16x16xf32>
    %110 = vector.broadcast %108 : f32 to vector<1x16x16xf32>
    %111 = arith.mulf %110, %109 : vector<1x16x16xf32>
    %112 = arith.addf %107, %111 : vector<1x16x16xf32>
    %c29 = arith.constant 29 : index
    %113 = memref.load %arg2[%c29] : memref<98xf32, #tpu.memory_space<smem>>
    %114 = vector.extract_strided_slice %92 {offsets = [0, 4, 0], sizes = [1, 16, 16], strides = [1, 1, 1]} : vector<1x22x16xf32> to vector<1x16x16xf32>
    %115 = vector.broadcast %113 : f32 to vector<1x16x16xf32>
    %116 = arith.mulf %115, %114 : vector<1x16x16xf32>
    %117 = arith.addf %112, %116 : vector<1x16x16xf32>
    %c36 = arith.constant 36 : index
    %118 = memref.load %arg2[%c36] : memref<98xf32, #tpu.memory_space<smem>>
    %119 = vector.extract_strided_slice %92 {offsets = [0, 5, 0], sizes = [1, 16, 16], strides = [1, 1, 1]} : vector<1x22x16xf32> to vector<1x16x16xf32>
    %120 = vector.broadcast %118 : f32 to vector<1x16x16xf32>
    %121 = arith.mulf %120, %119 : vector<1x16x16xf32>
    %122 = arith.addf %117, %121 : vector<1x16x16xf32>
    %c43 = arith.constant 43 : index
    %123 = memref.load %arg2[%c43] : memref<98xf32, #tpu.memory_space<smem>>
    %124 = vector.extract_strided_slice %92 {offsets = [0, 6, 0], sizes = [1, 16, 16], strides = [1, 1, 1]} : vector<1x22x16xf32> to vector<1x16x16xf32>
    %125 = vector.broadcast %123 : f32 to vector<1x16x16xf32>
    %126 = arith.mulf %125, %124 : vector<1x16x16xf32>
    %127 = arith.addf %122, %126 : vector<1x16x16xf32>
    %128 = vector.extract_strided_slice %90 {offsets = [0, 1, 0, 0], sizes = [1, 1, 22, 16], strides = [1, 1, 1, 1]} : vector<1x2x22x16xf32> to vector<1x1x22x16xf32>
    %129 = vector.shape_cast %128 : vector<1x1x22x16xf32> to vector<1x22x16xf32>
    %c50 = arith.constant 50 : index
    %130 = memref.load %arg2[%c50] : memref<98xf32, #tpu.memory_space<smem>>
    %131 = vector.extract_strided_slice %129 {offsets = [0, 0, 0], sizes = [1, 16, 16], strides = [1, 1, 1]} : vector<1x22x16xf32> to vector<1x16x16xf32>
    %132 = vector.broadcast %130 : f32 to vector<1x16x16xf32>
    %133 = arith.mulf %132, %131 : vector<1x16x16xf32>
    %134 = arith.addf %127, %133 : vector<1x16x16xf32>
    %c57 = arith.constant 57 : index
    %135 = memref.load %arg2[%c57] : memref<98xf32, #tpu.memory_space<smem>>
    %136 = vector.extract_strided_slice %129 {offsets = [0, 1, 0], sizes = [1, 16, 16], strides = [1, 1, 1]} : vector<1x22x16xf32> to vector<1x16x16xf32>
    %137 = vector.broadcast %135 : f32 to vector<1x16x16xf32>
    %138 = arith.mulf %137, %136 : vector<1x16x16xf32>
    %139 = arith.addf %134, %138 : vector<1x16x16xf32>
    %c64 = arith.constant 64 : index
    %140 = memref.load %arg2[%c64] : memref<98xf32, #tpu.memory_space<smem>>
    %141 = vector.extract_strided_slice %129 {offsets = [0, 2, 0], sizes = [1, 16, 16], strides = [1, 1, 1]} : vector<1x22x16xf32> to vector<1x16x16xf32>
    %142 = vector.broadcast %140 : f32 to vector<1x16x16xf32>
    %143 = arith.mulf %142, %141 : vector<1x16x16xf32>
    %144 = arith.addf %139, %143 : vector<1x16x16xf32>
    %c71 = arith.constant 71 : index
    %145 = memref.load %arg2[%c71] : memref<98xf32, #tpu.memory_space<smem>>
    %146 = vector.extract_strided_slice %129 {offsets = [0, 3, 0], sizes = [1, 16, 16], strides = [1, 1, 1]} : vector<1x22x16xf32> to vector<1x16x16xf32>
    %147 = vector.broadcast %145 : f32 to vector<1x16x16xf32>
    %148 = arith.mulf %147, %146 : vector<1x16x16xf32>
    %149 = arith.addf %144, %148 : vector<1x16x16xf32>
    %c78 = arith.constant 78 : index
    %150 = memref.load %arg2[%c78] : memref<98xf32, #tpu.memory_space<smem>>
    %151 = vector.extract_strided_slice %129 {offsets = [0, 4, 0], sizes = [1, 16, 16], strides = [1, 1, 1]} : vector<1x22x16xf32> to vector<1x16x16xf32>
    %152 = vector.broadcast %150 : f32 to vector<1x16x16xf32>
    %153 = arith.mulf %152, %151 : vector<1x16x16xf32>
    %154 = arith.addf %149, %153 : vector<1x16x16xf32>
    %c85 = arith.constant 85 : index
    %155 = memref.load %arg2[%c85] : memref<98xf32, #tpu.memory_space<smem>>
    %156 = vector.extract_strided_slice %129 {offsets = [0, 5, 0], sizes = [1, 16, 16], strides = [1, 1, 1]} : vector<1x22x16xf32> to vector<1x16x16xf32>
    %157 = vector.broadcast %155 : f32 to vector<1x16x16xf32>
    %158 = arith.mulf %157, %156 : vector<1x16x16xf32>
    %159 = arith.addf %154, %158 : vector<1x16x16xf32>
    %c92 = arith.constant 92 : index
    %160 = memref.load %arg2[%c92] : memref<98xf32, #tpu.memory_space<smem>>
    %161 = vector.extract_strided_slice %129 {offsets = [0, 6, 0], sizes = [1, 16, 16], strides = [1, 1, 1]} : vector<1x22x16xf32> to vector<1x16x16xf32>
    %162 = vector.broadcast %160 : f32 to vector<1x16x16xf32>
    %163 = arith.mulf %162, %161 : vector<1x16x16xf32>
    %164 = arith.addf %159, %163 : vector<1x16x16xf32>
    %165 = vector.extract_strided_slice %12 {offsets = [0, 0, 0, 2], sizes = [1, 2, 22, 16], strides = [1, 1, 1, 1]} : vector<1x2x22x22xf32> to vector<1x2x22x16xf32>
    %166 = vector.extract_strided_slice %165 {offsets = [0, 0, 0, 0], sizes = [1, 1, 22, 16], strides = [1, 1, 1, 1]} : vector<1x2x22x16xf32> to vector<1x1x22x16xf32>
    %167 = vector.shape_cast %166 : vector<1x1x22x16xf32> to vector<1x22x16xf32>
    %c2 = arith.constant 2 : index
    %168 = memref.load %arg2[%c2] : memref<98xf32, #tpu.memory_space<smem>>
    %169 = vector.extract_strided_slice %167 {offsets = [0, 0, 0], sizes = [1, 16, 16], strides = [1, 1, 1]} : vector<1x22x16xf32> to vector<1x16x16xf32>
    %170 = vector.broadcast %168 : f32 to vector<1x16x16xf32>
    %171 = arith.mulf %170, %169 : vector<1x16x16xf32>
    %172 = arith.addf %164, %171 : vector<1x16x16xf32>
    %c9 = arith.constant 9 : index
    %173 = memref.load %arg2[%c9] : memref<98xf32, #tpu.memory_space<smem>>
    %174 = vector.extract_strided_slice %167 {offsets = [0, 1, 0], sizes = [1, 16, 16], strides = [1, 1, 1]} : vector<1x22x16xf32> to vector<1x16x16xf32>
    %175 = vector.broadcast %173 : f32 to vector<1x16x16xf32>
    %176 = arith.mulf %175, %174 : vector<1x16x16xf32>
    %177 = arith.addf %172, %176 : vector<1x16x16xf32>
    %c16 = arith.constant 16 : index
    %178 = memref.load %arg2[%c16] : memref<98xf32, #tpu.memory_space<smem>>
    %179 = vector.extract_strided_slice %167 {offsets = [0, 2, 0], sizes = [1, 16, 16], strides = [1, 1, 1]} : vector<1x22x16xf32> to vector<1x16x16xf32>
    %180 = vector.broadcast %178 : f32 to vector<1x16x16xf32>
    %181 = arith.mulf %180, %179 : vector<1x16x16xf32>
    %182 = arith.addf %177, %181 : vector<1x16x16xf32>
    %c23 = arith.constant 23 : index
    %183 = memref.load %arg2[%c23] : memref<98xf32, #tpu.memory_space<smem>>
    %184 = vector.extract_strided_slice %167 {offsets = [0, 3, 0], sizes = [1, 16, 16], strides = [1, 1, 1]} : vector<1x22x16xf32> to vector<1x16x16xf32>
    %185 = vector.broadcast %183 : f32 to vector<1x16x16xf32>
    %186 = arith.mulf %185, %184 : vector<1x16x16xf32>
    %187 = arith.addf %182, %186 : vector<1x16x16xf32>
    %c30 = arith.constant 30 : index
    %188 = memref.load %arg2[%c30] : memref<98xf32, #tpu.memory_space<smem>>
    %189 = vector.extract_strided_slice %167 {offsets = [0, 4, 0], sizes = [1, 16, 16], strides = [1, 1, 1]} : vector<1x22x16xf32> to vector<1x16x16xf32>
    %190 = vector.broadcast %188 : f32 to vector<1x16x16xf32>
    %191 = arith.mulf %190, %189 : vector<1x16x16xf32>
    %192 = arith.addf %187, %191 : vector<1x16x16xf32>
    %c37 = arith.constant 37 : index
    %193 = memref.load %arg2[%c37] : memref<98xf32, #tpu.memory_space<smem>>
    %194 = vector.extract_strided_slice %167 {offsets = [0, 5, 0], sizes = [1, 16, 16], strides = [1, 1, 1]} : vector<1x22x16xf32> to vector<1x16x16xf32>
    %195 = vector.broadcast %193 : f32 to vector<1x16x16xf32>
    %196 = arith.mulf %195, %194 : vector<1x16x16xf32>
    %197 = arith.addf %192, %196 : vector<1x16x16xf32>
    %c44 = arith.constant 44 : index
    %198 = memref.load %arg2[%c44] : memref<98xf32, #tpu.memory_space<smem>>
    %199 = vector.extract_strided_slice %167 {offsets = [0, 6, 0], sizes = [1, 16, 16], strides = [1, 1, 1]} : vector<1x22x16xf32> to vector<1x16x16xf32>
    %200 = vector.broadcast %198 : f32 to vector<1x16x16xf32>
    %201 = arith.mulf %200, %199 : vector<1x16x16xf32>
    %202 = arith.addf %197, %201 : vector<1x16x16xf32>
    %203 = vector.extract_strided_slice %165 {offsets = [0, 1, 0, 0], sizes = [1, 1, 22, 16], strides = [1, 1, 1, 1]} : vector<1x2x22x16xf32> to vector<1x1x22x16xf32>
    %204 = vector.shape_cast %203 : vector<1x1x22x16xf32> to vector<1x22x16xf32>
    %c51 = arith.constant 51 : index
    %205 = memref.load %arg2[%c51] : memref<98xf32, #tpu.memory_space<smem>>
    %206 = vector.extract_strided_slice %204 {offsets = [0, 0, 0], sizes = [1, 16, 16], strides = [1, 1, 1]} : vector<1x22x16xf32> to vector<1x16x16xf32>
    %207 = vector.broadcast %205 : f32 to vector<1x16x16xf32>
    %208 = arith.mulf %207, %206 : vector<1x16x16xf32>
    %209 = arith.addf %202, %208 : vector<1x16x16xf32>
    %c58 = arith.constant 58 : index
    %210 = memref.load %arg2[%c58] : memref<98xf32, #tpu.memory_space<smem>>
    %211 = vector.extract_strided_slice %204 {offsets = [0, 1, 0], sizes = [1, 16, 16], strides = [1, 1, 1]} : vector<1x22x16xf32> to vector<1x16x16xf32>
    %212 = vector.broadcast %210 : f32 to vector<1x16x16xf32>
    %213 = arith.mulf %212, %211 : vector<1x16x16xf32>
    %214 = arith.addf %209, %213 : vector<1x16x16xf32>
    %c65 = arith.constant 65 : index
    %215 = memref.load %arg2[%c65] : memref<98xf32, #tpu.memory_space<smem>>
    %216 = vector.extract_strided_slice %204 {offsets = [0, 2, 0], sizes = [1, 16, 16], strides = [1, 1, 1]} : vector<1x22x16xf32> to vector<1x16x16xf32>
    %217 = vector.broadcast %215 : f32 to vector<1x16x16xf32>
    %218 = arith.mulf %217, %216 : vector<1x16x16xf32>
    %219 = arith.addf %214, %218 : vector<1x16x16xf32>
    %c72 = arith.constant 72 : index
    %220 = memref.load %arg2[%c72] : memref<98xf32, #tpu.memory_space<smem>>
    %221 = vector.extract_strided_slice %204 {offsets = [0, 3, 0], sizes = [1, 16, 16], strides = [1, 1, 1]} : vector<1x22x16xf32> to vector<1x16x16xf32>
    %222 = vector.broadcast %220 : f32 to vector<1x16x16xf32>
    %223 = arith.mulf %222, %221 : vector<1x16x16xf32>
    %224 = arith.addf %219, %223 : vector<1x16x16xf32>
    %c79 = arith.constant 79 : index
    %225 = memref.load %arg2[%c79] : memref<98xf32, #tpu.memory_space<smem>>
    %226 = vector.extract_strided_slice %204 {offsets = [0, 4, 0], sizes = [1, 16, 16], strides = [1, 1, 1]} : vector<1x22x16xf32> to vector<1x16x16xf32>
    %227 = vector.broadcast %225 : f32 to vector<1x16x16xf32>
    %228 = arith.mulf %227, %226 : vector<1x16x16xf32>
    %229 = arith.addf %224, %228 : vector<1x16x16xf32>
    %c86 = arith.constant 86 : index
    %230 = memref.load %arg2[%c86] : memref<98xf32, #tpu.memory_space<smem>>
    %231 = vector.extract_strided_slice %204 {offsets = [0, 5, 0], sizes = [1, 16, 16], strides = [1, 1, 1]} : vector<1x22x16xf32> to vector<1x16x16xf32>
    %232 = vector.broadcast %230 : f32 to vector<1x16x16xf32>
    %233 = arith.mulf %232, %231 : vector<1x16x16xf32>
    %234 = arith.addf %229, %233 : vector<1x16x16xf32>
    %c93 = arith.constant 93 : index
    %235 = memref.load %arg2[%c93] : memref<98xf32, #tpu.memory_space<smem>>
    %236 = vector.extract_strided_slice %204 {offsets = [0, 6, 0], sizes = [1, 16, 16], strides = [1, 1, 1]} : vector<1x22x16xf32> to vector<1x16x16xf32>
    %237 = vector.broadcast %235 : f32 to vector<1x16x16xf32>
    %238 = arith.mulf %237, %236 : vector<1x16x16xf32>
    %239 = arith.addf %234, %238 : vector<1x16x16xf32>
    %240 = vector.extract_strided_slice %12 {offsets = [0, 0, 0, 3], sizes = [1, 2, 22, 16], strides = [1, 1, 1, 1]} : vector<1x2x22x22xf32> to vector<1x2x22x16xf32>
    %241 = vector.extract_strided_slice %240 {offsets = [0, 0, 0, 0], sizes = [1, 1, 22, 16], strides = [1, 1, 1, 1]} : vector<1x2x22x16xf32> to vector<1x1x22x16xf32>
    %242 = vector.shape_cast %241 : vector<1x1x22x16xf32> to vector<1x22x16xf32>
    %c3 = arith.constant 3 : index
    %243 = memref.load %arg2[%c3] : memref<98xf32, #tpu.memory_space<smem>>
    %244 = vector.extract_strided_slice %242 {offsets = [0, 0, 0], sizes = [1, 16, 16], strides = [1, 1, 1]} : vector<1x22x16xf32> to vector<1x16x16xf32>
    %245 = vector.broadcast %243 : f32 to vector<1x16x16xf32>
    %246 = arith.mulf %245, %244 : vector<1x16x16xf32>
    %247 = arith.addf %239, %246 : vector<1x16x16xf32>
    %c10 = arith.constant 10 : index
    %248 = memref.load %arg2[%c10] : memref<98xf32, #tpu.memory_space<smem>>
    %249 = vector.extract_strided_slice %242 {offsets = [0, 1, 0], sizes = [1, 16, 16], strides = [1, 1, 1]} : vector<1x22x16xf32> to vector<1x16x16xf32>
    %250 = vector.broadcast %248 : f32 to vector<1x16x16xf32>
    %251 = arith.mulf %250, %249 : vector<1x16x16xf32>
    %252 = arith.addf %247, %251 : vector<1x16x16xf32>
    %c17 = arith.constant 17 : index
    %253 = memref.load %arg2[%c17] : memref<98xf32, #tpu.memory_space<smem>>
    %254 = vector.extract_strided_slice %242 {offsets = [0, 2, 0], sizes = [1, 16, 16], strides = [1, 1, 1]} : vector<1x22x16xf32> to vector<1x16x16xf32>
    %255 = vector.broadcast %253 : f32 to vector<1x16x16xf32>
    %256 = arith.mulf %255, %254 : vector<1x16x16xf32>
    %257 = arith.addf %252, %256 : vector<1x16x16xf32>
    %c24 = arith.constant 24 : index
    %258 = memref.load %arg2[%c24] : memref<98xf32, #tpu.memory_space<smem>>
    %259 = vector.extract_strided_slice %242 {offsets = [0, 3, 0], sizes = [1, 16, 16], strides = [1, 1, 1]} : vector<1x22x16xf32> to vector<1x16x16xf32>
    %260 = vector.broadcast %258 : f32 to vector<1x16x16xf32>
    %261 = arith.mulf %260, %259 : vector<1x16x16xf32>
    %262 = arith.addf %257, %261 : vector<1x16x16xf32>
    %c31 = arith.constant 31 : index
    %263 = memref.load %arg2[%c31] : memref<98xf32, #tpu.memory_space<smem>>
    %264 = vector.extract_strided_slice %242 {offsets = [0, 4, 0], sizes = [1, 16, 16], strides = [1, 1, 1]} : vector<1x22x16xf32> to vector<1x16x16xf32>
    %265 = vector.broadcast %263 : f32 to vector<1x16x16xf32>
    %266 = arith.mulf %265, %264 : vector<1x16x16xf32>
    %267 = arith.addf %262, %266 : vector<1x16x16xf32>
    %c38 = arith.constant 38 : index
    %268 = memref.load %arg2[%c38] : memref<98xf32, #tpu.memory_space<smem>>
    %269 = vector.extract_strided_slice %242 {offsets = [0, 5, 0], sizes = [1, 16, 16], strides = [1, 1, 1]} : vector<1x22x16xf32> to vector<1x16x16xf32>
    %270 = vector.broadcast %268 : f32 to vector<1x16x16xf32>
    %271 = arith.mulf %270, %269 : vector<1x16x16xf32>
    %272 = arith.addf %267, %271 : vector<1x16x16xf32>
    %c45 = arith.constant 45 : index
    %273 = memref.load %arg2[%c45] : memref<98xf32, #tpu.memory_space<smem>>
    %274 = vector.extract_strided_slice %242 {offsets = [0, 6, 0], sizes = [1, 16, 16], strides = [1, 1, 1]} : vector<1x22x16xf32> to vector<1x16x16xf32>
    %275 = vector.broadcast %273 : f32 to vector<1x16x16xf32>
    %276 = arith.mulf %275, %274 : vector<1x16x16xf32>
    %277 = arith.addf %272, %276 : vector<1x16x16xf32>
    %278 = vector.extract_strided_slice %240 {offsets = [0, 1, 0, 0], sizes = [1, 1, 22, 16], strides = [1, 1, 1, 1]} : vector<1x2x22x16xf32> to vector<1x1x22x16xf32>
    %279 = vector.shape_cast %278 : vector<1x1x22x16xf32> to vector<1x22x16xf32>
    %c52 = arith.constant 52 : index
    %280 = memref.load %arg2[%c52] : memref<98xf32, #tpu.memory_space<smem>>
    %281 = vector.extract_strided_slice %279 {offsets = [0, 0, 0], sizes = [1, 16, 16], strides = [1, 1, 1]} : vector<1x22x16xf32> to vector<1x16x16xf32>
    %282 = vector.broadcast %280 : f32 to vector<1x16x16xf32>
    %283 = arith.mulf %282, %281 : vector<1x16x16xf32>
    %284 = arith.addf %277, %283 : vector<1x16x16xf32>
    %c59 = arith.constant 59 : index
    %285 = memref.load %arg2[%c59] : memref<98xf32, #tpu.memory_space<smem>>
    %286 = vector.extract_strided_slice %279 {offsets = [0, 1, 0], sizes = [1, 16, 16], strides = [1, 1, 1]} : vector<1x22x16xf32> to vector<1x16x16xf32>
    %287 = vector.broadcast %285 : f32 to vector<1x16x16xf32>
    %288 = arith.mulf %287, %286 : vector<1x16x16xf32>
    %289 = arith.addf %284, %288 : vector<1x16x16xf32>
    %c66 = arith.constant 66 : index
    %290 = memref.load %arg2[%c66] : memref<98xf32, #tpu.memory_space<smem>>
    %291 = vector.extract_strided_slice %279 {offsets = [0, 2, 0], sizes = [1, 16, 16], strides = [1, 1, 1]} : vector<1x22x16xf32> to vector<1x16x16xf32>
    %292 = vector.broadcast %290 : f32 to vector<1x16x16xf32>
    %293 = arith.mulf %292, %291 : vector<1x16x16xf32>
    %294 = arith.addf %289, %293 : vector<1x16x16xf32>
    %c73 = arith.constant 73 : index
    %295 = memref.load %arg2[%c73] : memref<98xf32, #tpu.memory_space<smem>>
    %296 = vector.extract_strided_slice %279 {offsets = [0, 3, 0], sizes = [1, 16, 16], strides = [1, 1, 1]} : vector<1x22x16xf32> to vector<1x16x16xf32>
    %297 = vector.broadcast %295 : f32 to vector<1x16x16xf32>
    %298 = arith.mulf %297, %296 : vector<1x16x16xf32>
    %299 = arith.addf %294, %298 : vector<1x16x16xf32>
    %c80 = arith.constant 80 : index
    %300 = memref.load %arg2[%c80] : memref<98xf32, #tpu.memory_space<smem>>
    %301 = vector.extract_strided_slice %279 {offsets = [0, 4, 0], sizes = [1, 16, 16], strides = [1, 1, 1]} : vector<1x22x16xf32> to vector<1x16x16xf32>
    %302 = vector.broadcast %300 : f32 to vector<1x16x16xf32>
    %303 = arith.mulf %302, %301 : vector<1x16x16xf32>
    %304 = arith.addf %299, %303 : vector<1x16x16xf32>
    %c87 = arith.constant 87 : index
    %305 = memref.load %arg2[%c87] : memref<98xf32, #tpu.memory_space<smem>>
    %306 = vector.extract_strided_slice %279 {offsets = [0, 5, 0], sizes = [1, 16, 16], strides = [1, 1, 1]} : vector<1x22x16xf32> to vector<1x16x16xf32>
    %307 = vector.broadcast %305 : f32 to vector<1x16x16xf32>
    %308 = arith.mulf %307, %306 : vector<1x16x16xf32>
    %309 = arith.addf %304, %308 : vector<1x16x16xf32>
    %c94 = arith.constant 94 : index
    %310 = memref.load %arg2[%c94] : memref<98xf32, #tpu.memory_space<smem>>
    %311 = vector.extract_strided_slice %279 {offsets = [0, 6, 0], sizes = [1, 16, 16], strides = [1, 1, 1]} : vector<1x22x16xf32> to vector<1x16x16xf32>
    %312 = vector.broadcast %310 : f32 to vector<1x16x16xf32>
    %313 = arith.mulf %312, %311 : vector<1x16x16xf32>
    %314 = arith.addf %309, %313 : vector<1x16x16xf32>
    %315 = vector.extract_strided_slice %12 {offsets = [0, 0, 0, 4], sizes = [1, 2, 22, 16], strides = [1, 1, 1, 1]} : vector<1x2x22x22xf32> to vector<1x2x22x16xf32>
    %316 = vector.extract_strided_slice %315 {offsets = [0, 0, 0, 0], sizes = [1, 1, 22, 16], strides = [1, 1, 1, 1]} : vector<1x2x22x16xf32> to vector<1x1x22x16xf32>
    %317 = vector.shape_cast %316 : vector<1x1x22x16xf32> to vector<1x22x16xf32>
    %c4 = arith.constant 4 : index
    %318 = memref.load %arg2[%c4] : memref<98xf32, #tpu.memory_space<smem>>
    %319 = vector.extract_strided_slice %317 {offsets = [0, 0, 0], sizes = [1, 16, 16], strides = [1, 1, 1]} : vector<1x22x16xf32> to vector<1x16x16xf32>
    %320 = vector.broadcast %318 : f32 to vector<1x16x16xf32>
    %321 = arith.mulf %320, %319 : vector<1x16x16xf32>
    %322 = arith.addf %314, %321 : vector<1x16x16xf32>
    %c11 = arith.constant 11 : index
    %323 = memref.load %arg2[%c11] : memref<98xf32, #tpu.memory_space<smem>>
    %324 = vector.extract_strided_slice %317 {offsets = [0, 1, 0], sizes = [1, 16, 16], strides = [1, 1, 1]} : vector<1x22x16xf32> to vector<1x16x16xf32>
    %325 = vector.broadcast %323 : f32 to vector<1x16x16xf32>
    %326 = arith.mulf %325, %324 : vector<1x16x16xf32>
    %327 = arith.addf %322, %326 : vector<1x16x16xf32>
    %c18 = arith.constant 18 : index
    %328 = memref.load %arg2[%c18] : memref<98xf32, #tpu.memory_space<smem>>
    %329 = vector.extract_strided_slice %317 {offsets = [0, 2, 0], sizes = [1, 16, 16], strides = [1, 1, 1]} : vector<1x22x16xf32> to vector<1x16x16xf32>
    %330 = vector.broadcast %328 : f32 to vector<1x16x16xf32>
    %331 = arith.mulf %330, %329 : vector<1x16x16xf32>
    %332 = arith.addf %327, %331 : vector<1x16x16xf32>
    %c25 = arith.constant 25 : index
    %333 = memref.load %arg2[%c25] : memref<98xf32, #tpu.memory_space<smem>>
    %334 = vector.extract_strided_slice %317 {offsets = [0, 3, 0], sizes = [1, 16, 16], strides = [1, 1, 1]} : vector<1x22x16xf32> to vector<1x16x16xf32>
    %335 = vector.broadcast %333 : f32 to vector<1x16x16xf32>
    %336 = arith.mulf %335, %334 : vector<1x16x16xf32>
    %337 = arith.addf %332, %336 : vector<1x16x16xf32>
    %c32 = arith.constant 32 : index
    %338 = memref.load %arg2[%c32] : memref<98xf32, #tpu.memory_space<smem>>
    %339 = vector.extract_strided_slice %317 {offsets = [0, 4, 0], sizes = [1, 16, 16], strides = [1, 1, 1]} : vector<1x22x16xf32> to vector<1x16x16xf32>
    %340 = vector.broadcast %338 : f32 to vector<1x16x16xf32>
    %341 = arith.mulf %340, %339 : vector<1x16x16xf32>
    %342 = arith.addf %337, %341 : vector<1x16x16xf32>
    %c39 = arith.constant 39 : index
    %343 = memref.load %arg2[%c39] : memref<98xf32, #tpu.memory_space<smem>>
    %344 = vector.extract_strided_slice %317 {offsets = [0, 5, 0], sizes = [1, 16, 16], strides = [1, 1, 1]} : vector<1x22x16xf32> to vector<1x16x16xf32>
    %345 = vector.broadcast %343 : f32 to vector<1x16x16xf32>
    %346 = arith.mulf %345, %344 : vector<1x16x16xf32>
    %347 = arith.addf %342, %346 : vector<1x16x16xf32>
    %c46 = arith.constant 46 : index
    %348 = memref.load %arg2[%c46] : memref<98xf32, #tpu.memory_space<smem>>
    %349 = vector.extract_strided_slice %317 {offsets = [0, 6, 0], sizes = [1, 16, 16], strides = [1, 1, 1]} : vector<1x22x16xf32> to vector<1x16x16xf32>
    %350 = vector.broadcast %348 : f32 to vector<1x16x16xf32>
    %351 = arith.mulf %350, %349 : vector<1x16x16xf32>
    %352 = arith.addf %347, %351 : vector<1x16x16xf32>
    %353 = vector.extract_strided_slice %315 {offsets = [0, 1, 0, 0], sizes = [1, 1, 22, 16], strides = [1, 1, 1, 1]} : vector<1x2x22x16xf32> to vector<1x1x22x16xf32>
    %354 = vector.shape_cast %353 : vector<1x1x22x16xf32> to vector<1x22x16xf32>
    %c53 = arith.constant 53 : index
    %355 = memref.load %arg2[%c53] : memref<98xf32, #tpu.memory_space<smem>>
    %356 = vector.extract_strided_slice %354 {offsets = [0, 0, 0], sizes = [1, 16, 16], strides = [1, 1, 1]} : vector<1x22x16xf32> to vector<1x16x16xf32>
    %357 = vector.broadcast %355 : f32 to vector<1x16x16xf32>
    %358 = arith.mulf %357, %356 : vector<1x16x16xf32>
    %359 = arith.addf %352, %358 : vector<1x16x16xf32>
    %c60 = arith.constant 60 : index
    %360 = memref.load %arg2[%c60] : memref<98xf32, #tpu.memory_space<smem>>
    %361 = vector.extract_strided_slice %354 {offsets = [0, 1, 0], sizes = [1, 16, 16], strides = [1, 1, 1]} : vector<1x22x16xf32> to vector<1x16x16xf32>
    %362 = vector.broadcast %360 : f32 to vector<1x16x16xf32>
    %363 = arith.mulf %362, %361 : vector<1x16x16xf32>
    %364 = arith.addf %359, %363 : vector<1x16x16xf32>
    %c67 = arith.constant 67 : index
    %365 = memref.load %arg2[%c67] : memref<98xf32, #tpu.memory_space<smem>>
    %366 = vector.extract_strided_slice %354 {offsets = [0, 2, 0], sizes = [1, 16, 16], strides = [1, 1, 1]} : vector<1x22x16xf32> to vector<1x16x16xf32>
    %367 = vector.broadcast %365 : f32 to vector<1x16x16xf32>
    %368 = arith.mulf %367, %366 : vector<1x16x16xf32>
    %369 = arith.addf %364, %368 : vector<1x16x16xf32>
    %c74 = arith.constant 74 : index
    %370 = memref.load %arg2[%c74] : memref<98xf32, #tpu.memory_space<smem>>
    %371 = vector.extract_strided_slice %354 {offsets = [0, 3, 0], sizes = [1, 16, 16], strides = [1, 1, 1]} : vector<1x22x16xf32> to vector<1x16x16xf32>
    %372 = vector.broadcast %370 : f32 to vector<1x16x16xf32>
    %373 = arith.mulf %372, %371 : vector<1x16x16xf32>
    %374 = arith.addf %369, %373 : vector<1x16x16xf32>
    %c81 = arith.constant 81 : index
    %375 = memref.load %arg2[%c81] : memref<98xf32, #tpu.memory_space<smem>>
    %376 = vector.extract_strided_slice %354 {offsets = [0, 4, 0], sizes = [1, 16, 16], strides = [1, 1, 1]} : vector<1x22x16xf32> to vector<1x16x16xf32>
    %377 = vector.broadcast %375 : f32 to vector<1x16x16xf32>
    %378 = arith.mulf %377, %376 : vector<1x16x16xf32>
    %379 = arith.addf %374, %378 : vector<1x16x16xf32>
    %c88 = arith.constant 88 : index
    %380 = memref.load %arg2[%c88] : memref<98xf32, #tpu.memory_space<smem>>
    %381 = vector.extract_strided_slice %354 {offsets = [0, 5, 0], sizes = [1, 16, 16], strides = [1, 1, 1]} : vector<1x22x16xf32> to vector<1x16x16xf32>
    %382 = vector.broadcast %380 : f32 to vector<1x16x16xf32>
    %383 = arith.mulf %382, %381 : vector<1x16x16xf32>
    %384 = arith.addf %379, %383 : vector<1x16x16xf32>
    %c95 = arith.constant 95 : index
    %385 = memref.load %arg2[%c95] : memref<98xf32, #tpu.memory_space<smem>>
    %386 = vector.extract_strided_slice %354 {offsets = [0, 6, 0], sizes = [1, 16, 16], strides = [1, 1, 1]} : vector<1x22x16xf32> to vector<1x16x16xf32>
    %387 = vector.broadcast %385 : f32 to vector<1x16x16xf32>
    %388 = arith.mulf %387, %386 : vector<1x16x16xf32>
    %389 = arith.addf %384, %388 : vector<1x16x16xf32>
    %390 = vector.extract_strided_slice %12 {offsets = [0, 0, 0, 5], sizes = [1, 2, 22, 16], strides = [1, 1, 1, 1]} : vector<1x2x22x22xf32> to vector<1x2x22x16xf32>
    %391 = vector.extract_strided_slice %390 {offsets = [0, 0, 0, 0], sizes = [1, 1, 22, 16], strides = [1, 1, 1, 1]} : vector<1x2x22x16xf32> to vector<1x1x22x16xf32>
    %392 = vector.shape_cast %391 : vector<1x1x22x16xf32> to vector<1x22x16xf32>
    %c5 = arith.constant 5 : index
    %393 = memref.load %arg2[%c5] : memref<98xf32, #tpu.memory_space<smem>>
    %394 = vector.extract_strided_slice %392 {offsets = [0, 0, 0], sizes = [1, 16, 16], strides = [1, 1, 1]} : vector<1x22x16xf32> to vector<1x16x16xf32>
    %395 = vector.broadcast %393 : f32 to vector<1x16x16xf32>
    %396 = arith.mulf %395, %394 : vector<1x16x16xf32>
    %397 = arith.addf %389, %396 : vector<1x16x16xf32>
    %c12 = arith.constant 12 : index
    %398 = memref.load %arg2[%c12] : memref<98xf32, #tpu.memory_space<smem>>
    %399 = vector.extract_strided_slice %392 {offsets = [0, 1, 0], sizes = [1, 16, 16], strides = [1, 1, 1]} : vector<1x22x16xf32> to vector<1x16x16xf32>
    %400 = vector.broadcast %398 : f32 to vector<1x16x16xf32>
    %401 = arith.mulf %400, %399 : vector<1x16x16xf32>
    %402 = arith.addf %397, %401 : vector<1x16x16xf32>
    %c19 = arith.constant 19 : index
    %403 = memref.load %arg2[%c19] : memref<98xf32, #tpu.memory_space<smem>>
    %404 = vector.extract_strided_slice %392 {offsets = [0, 2, 0], sizes = [1, 16, 16], strides = [1, 1, 1]} : vector<1x22x16xf32> to vector<1x16x16xf32>
    %405 = vector.broadcast %403 : f32 to vector<1x16x16xf32>
    %406 = arith.mulf %405, %404 : vector<1x16x16xf32>
    %407 = arith.addf %402, %406 : vector<1x16x16xf32>
    %c26 = arith.constant 26 : index
    %408 = memref.load %arg2[%c26] : memref<98xf32, #tpu.memory_space<smem>>
    %409 = vector.extract_strided_slice %392 {offsets = [0, 3, 0], sizes = [1, 16, 16], strides = [1, 1, 1]} : vector<1x22x16xf32> to vector<1x16x16xf32>
    %410 = vector.broadcast %408 : f32 to vector<1x16x16xf32>
    %411 = arith.mulf %410, %409 : vector<1x16x16xf32>
    %412 = arith.addf %407, %411 : vector<1x16x16xf32>
    %c33 = arith.constant 33 : index
    %413 = memref.load %arg2[%c33] : memref<98xf32, #tpu.memory_space<smem>>
    %414 = vector.extract_strided_slice %392 {offsets = [0, 4, 0], sizes = [1, 16, 16], strides = [1, 1, 1]} : vector<1x22x16xf32> to vector<1x16x16xf32>
    %415 = vector.broadcast %413 : f32 to vector<1x16x16xf32>
    %416 = arith.mulf %415, %414 : vector<1x16x16xf32>
    %417 = arith.addf %412, %416 : vector<1x16x16xf32>
    %c40 = arith.constant 40 : index
    %418 = memref.load %arg2[%c40] : memref<98xf32, #tpu.memory_space<smem>>
    %419 = vector.extract_strided_slice %392 {offsets = [0, 5, 0], sizes = [1, 16, 16], strides = [1, 1, 1]} : vector<1x22x16xf32> to vector<1x16x16xf32>
    %420 = vector.broadcast %418 : f32 to vector<1x16x16xf32>
    %421 = arith.mulf %420, %419 : vector<1x16x16xf32>
    %422 = arith.addf %417, %421 : vector<1x16x16xf32>
    %c47 = arith.constant 47 : index
    %423 = memref.load %arg2[%c47] : memref<98xf32, #tpu.memory_space<smem>>
    %424 = vector.extract_strided_slice %392 {offsets = [0, 6, 0], sizes = [1, 16, 16], strides = [1, 1, 1]} : vector<1x22x16xf32> to vector<1x16x16xf32>
    %425 = vector.broadcast %423 : f32 to vector<1x16x16xf32>
    %426 = arith.mulf %425, %424 : vector<1x16x16xf32>
    %427 = arith.addf %422, %426 : vector<1x16x16xf32>
    %428 = vector.extract_strided_slice %390 {offsets = [0, 1, 0, 0], sizes = [1, 1, 22, 16], strides = [1, 1, 1, 1]} : vector<1x2x22x16xf32> to vector<1x1x22x16xf32>
    %429 = vector.shape_cast %428 : vector<1x1x22x16xf32> to vector<1x22x16xf32>
    %c54 = arith.constant 54 : index
    %430 = memref.load %arg2[%c54] : memref<98xf32, #tpu.memory_space<smem>>
    %431 = vector.extract_strided_slice %429 {offsets = [0, 0, 0], sizes = [1, 16, 16], strides = [1, 1, 1]} : vector<1x22x16xf32> to vector<1x16x16xf32>
    %432 = vector.broadcast %430 : f32 to vector<1x16x16xf32>
    %433 = arith.mulf %432, %431 : vector<1x16x16xf32>
    %434 = arith.addf %427, %433 : vector<1x16x16xf32>
    %c61 = arith.constant 61 : index
    %435 = memref.load %arg2[%c61] : memref<98xf32, #tpu.memory_space<smem>>
    %436 = vector.extract_strided_slice %429 {offsets = [0, 1, 0], sizes = [1, 16, 16], strides = [1, 1, 1]} : vector<1x22x16xf32> to vector<1x16x16xf32>
    %437 = vector.broadcast %435 : f32 to vector<1x16x16xf32>
    %438 = arith.mulf %437, %436 : vector<1x16x16xf32>
    %439 = arith.addf %434, %438 : vector<1x16x16xf32>
    %c68 = arith.constant 68 : index
    %440 = memref.load %arg2[%c68] : memref<98xf32, #tpu.memory_space<smem>>
    %441 = vector.extract_strided_slice %429 {offsets = [0, 2, 0], sizes = [1, 16, 16], strides = [1, 1, 1]} : vector<1x22x16xf32> to vector<1x16x16xf32>
    %442 = vector.broadcast %440 : f32 to vector<1x16x16xf32>
    %443 = arith.mulf %442, %441 : vector<1x16x16xf32>
    %444 = arith.addf %439, %443 : vector<1x16x16xf32>
    %c75 = arith.constant 75 : index
    %445 = memref.load %arg2[%c75] : memref<98xf32, #tpu.memory_space<smem>>
    %446 = vector.extract_strided_slice %429 {offsets = [0, 3, 0], sizes = [1, 16, 16], strides = [1, 1, 1]} : vector<1x22x16xf32> to vector<1x16x16xf32>
    %447 = vector.broadcast %445 : f32 to vector<1x16x16xf32>
    %448 = arith.mulf %447, %446 : vector<1x16x16xf32>
    %449 = arith.addf %444, %448 : vector<1x16x16xf32>
    %c82 = arith.constant 82 : index
    %450 = memref.load %arg2[%c82] : memref<98xf32, #tpu.memory_space<smem>>
    %451 = vector.extract_strided_slice %429 {offsets = [0, 4, 0], sizes = [1, 16, 16], strides = [1, 1, 1]} : vector<1x22x16xf32> to vector<1x16x16xf32>
    %452 = vector.broadcast %450 : f32 to vector<1x16x16xf32>
    %453 = arith.mulf %452, %451 : vector<1x16x16xf32>
    %454 = arith.addf %449, %453 : vector<1x16x16xf32>
    %c89 = arith.constant 89 : index
    %455 = memref.load %arg2[%c89] : memref<98xf32, #tpu.memory_space<smem>>
    %456 = vector.extract_strided_slice %429 {offsets = [0, 5, 0], sizes = [1, 16, 16], strides = [1, 1, 1]} : vector<1x22x16xf32> to vector<1x16x16xf32>
    %457 = vector.broadcast %455 : f32 to vector<1x16x16xf32>
    %458 = arith.mulf %457, %456 : vector<1x16x16xf32>
    %459 = arith.addf %454, %458 : vector<1x16x16xf32>
    %c96 = arith.constant 96 : index
    %460 = memref.load %arg2[%c96] : memref<98xf32, #tpu.memory_space<smem>>
    %461 = vector.extract_strided_slice %429 {offsets = [0, 6, 0], sizes = [1, 16, 16], strides = [1, 1, 1]} : vector<1x22x16xf32> to vector<1x16x16xf32>
    %462 = vector.broadcast %460 : f32 to vector<1x16x16xf32>
    %463 = arith.mulf %462, %461 : vector<1x16x16xf32>
    %464 = arith.addf %459, %463 : vector<1x16x16xf32>
    %465 = vector.extract_strided_slice %12 {offsets = [0, 0, 0, 6], sizes = [1, 2, 22, 16], strides = [1, 1, 1, 1]} : vector<1x2x22x22xf32> to vector<1x2x22x16xf32>
    %466 = vector.extract_strided_slice %465 {offsets = [0, 0, 0, 0], sizes = [1, 1, 22, 16], strides = [1, 1, 1, 1]} : vector<1x2x22x16xf32> to vector<1x1x22x16xf32>
    %467 = vector.shape_cast %466 : vector<1x1x22x16xf32> to vector<1x22x16xf32>
    %c6 = arith.constant 6 : index
    %468 = memref.load %arg2[%c6] : memref<98xf32, #tpu.memory_space<smem>>
    %469 = vector.extract_strided_slice %467 {offsets = [0, 0, 0], sizes = [1, 16, 16], strides = [1, 1, 1]} : vector<1x22x16xf32> to vector<1x16x16xf32>
    %470 = vector.broadcast %468 : f32 to vector<1x16x16xf32>
    %471 = arith.mulf %470, %469 : vector<1x16x16xf32>
    %472 = arith.addf %464, %471 : vector<1x16x16xf32>
    %c13 = arith.constant 13 : index
    %473 = memref.load %arg2[%c13] : memref<98xf32, #tpu.memory_space<smem>>
    %474 = vector.extract_strided_slice %467 {offsets = [0, 1, 0], sizes = [1, 16, 16], strides = [1, 1, 1]} : vector<1x22x16xf32> to vector<1x16x16xf32>
    %475 = vector.broadcast %473 : f32 to vector<1x16x16xf32>
    %476 = arith.mulf %475, %474 : vector<1x16x16xf32>
    %477 = arith.addf %472, %476 : vector<1x16x16xf32>
    %c20 = arith.constant 20 : index
    %478 = memref.load %arg2[%c20] : memref<98xf32, #tpu.memory_space<smem>>
    %479 = vector.extract_strided_slice %467 {offsets = [0, 2, 0], sizes = [1, 16, 16], strides = [1, 1, 1]} : vector<1x22x16xf32> to vector<1x16x16xf32>
    %480 = vector.broadcast %478 : f32 to vector<1x16x16xf32>
    %481 = arith.mulf %480, %479 : vector<1x16x16xf32>
    %482 = arith.addf %477, %481 : vector<1x16x16xf32>
    %c27 = arith.constant 27 : index
    %483 = memref.load %arg2[%c27] : memref<98xf32, #tpu.memory_space<smem>>
    %484 = vector.extract_strided_slice %467 {offsets = [0, 3, 0], sizes = [1, 16, 16], strides = [1, 1, 1]} : vector<1x22x16xf32> to vector<1x16x16xf32>
    %485 = vector.broadcast %483 : f32 to vector<1x16x16xf32>
    %486 = arith.mulf %485, %484 : vector<1x16x16xf32>
    %487 = arith.addf %482, %486 : vector<1x16x16xf32>
    %c34 = arith.constant 34 : index
    %488 = memref.load %arg2[%c34] : memref<98xf32, #tpu.memory_space<smem>>
    %489 = vector.extract_strided_slice %467 {offsets = [0, 4, 0], sizes = [1, 16, 16], strides = [1, 1, 1]} : vector<1x22x16xf32> to vector<1x16x16xf32>
    %490 = vector.broadcast %488 : f32 to vector<1x16x16xf32>
    %491 = arith.mulf %490, %489 : vector<1x16x16xf32>
    %492 = arith.addf %487, %491 : vector<1x16x16xf32>
    %c41 = arith.constant 41 : index
    %493 = memref.load %arg2[%c41] : memref<98xf32, #tpu.memory_space<smem>>
    %494 = vector.extract_strided_slice %467 {offsets = [0, 5, 0], sizes = [1, 16, 16], strides = [1, 1, 1]} : vector<1x22x16xf32> to vector<1x16x16xf32>
    %495 = vector.broadcast %493 : f32 to vector<1x16x16xf32>
    %496 = arith.mulf %495, %494 : vector<1x16x16xf32>
    %497 = arith.addf %492, %496 : vector<1x16x16xf32>
    %c48 = arith.constant 48 : index
    %498 = memref.load %arg2[%c48] : memref<98xf32, #tpu.memory_space<smem>>
    %499 = vector.extract_strided_slice %467 {offsets = [0, 6, 0], sizes = [1, 16, 16], strides = [1, 1, 1]} : vector<1x22x16xf32> to vector<1x16x16xf32>
    %500 = vector.broadcast %498 : f32 to vector<1x16x16xf32>
    %501 = arith.mulf %500, %499 : vector<1x16x16xf32>
    %502 = arith.addf %497, %501 : vector<1x16x16xf32>
    %503 = vector.extract_strided_slice %465 {offsets = [0, 1, 0, 0], sizes = [1, 1, 22, 16], strides = [1, 1, 1, 1]} : vector<1x2x22x16xf32> to vector<1x1x22x16xf32>
    %504 = vector.shape_cast %503 : vector<1x1x22x16xf32> to vector<1x22x16xf32>
    %c55 = arith.constant 55 : index
    %505 = memref.load %arg2[%c55] : memref<98xf32, #tpu.memory_space<smem>>
    %506 = vector.extract_strided_slice %504 {offsets = [0, 0, 0], sizes = [1, 16, 16], strides = [1, 1, 1]} : vector<1x22x16xf32> to vector<1x16x16xf32>
    %507 = vector.broadcast %505 : f32 to vector<1x16x16xf32>
    %508 = arith.mulf %507, %506 : vector<1x16x16xf32>
    %509 = arith.addf %502, %508 : vector<1x16x16xf32>
    %c62 = arith.constant 62 : index
    %510 = memref.load %arg2[%c62] : memref<98xf32, #tpu.memory_space<smem>>
    %511 = vector.extract_strided_slice %504 {offsets = [0, 1, 0], sizes = [1, 16, 16], strides = [1, 1, 1]} : vector<1x22x16xf32> to vector<1x16x16xf32>
    %512 = vector.broadcast %510 : f32 to vector<1x16x16xf32>
    %513 = arith.mulf %512, %511 : vector<1x16x16xf32>
    %514 = arith.addf %509, %513 : vector<1x16x16xf32>
    %c69 = arith.constant 69 : index
    %515 = memref.load %arg2[%c69] : memref<98xf32, #tpu.memory_space<smem>>
    %516 = vector.extract_strided_slice %504 {offsets = [0, 2, 0], sizes = [1, 16, 16], strides = [1, 1, 1]} : vector<1x22x16xf32> to vector<1x16x16xf32>
    %517 = vector.broadcast %515 : f32 to vector<1x16x16xf32>
    %518 = arith.mulf %517, %516 : vector<1x16x16xf32>
    %519 = arith.addf %514, %518 : vector<1x16x16xf32>
    %c76 = arith.constant 76 : index
    %520 = memref.load %arg2[%c76] : memref<98xf32, #tpu.memory_space<smem>>
    %521 = vector.extract_strided_slice %504 {offsets = [0, 3, 0], sizes = [1, 16, 16], strides = [1, 1, 1]} : vector<1x22x16xf32> to vector<1x16x16xf32>
    %522 = vector.broadcast %520 : f32 to vector<1x16x16xf32>
    %523 = arith.mulf %522, %521 : vector<1x16x16xf32>
    %524 = arith.addf %519, %523 : vector<1x16x16xf32>
    %c83 = arith.constant 83 : index
    %525 = memref.load %arg2[%c83] : memref<98xf32, #tpu.memory_space<smem>>
    %526 = vector.extract_strided_slice %504 {offsets = [0, 4, 0], sizes = [1, 16, 16], strides = [1, 1, 1]} : vector<1x22x16xf32> to vector<1x16x16xf32>
    %527 = vector.broadcast %525 : f32 to vector<1x16x16xf32>
    %528 = arith.mulf %527, %526 : vector<1x16x16xf32>
    %529 = arith.addf %524, %528 : vector<1x16x16xf32>
    %c90 = arith.constant 90 : index
    %530 = memref.load %arg2[%c90] : memref<98xf32, #tpu.memory_space<smem>>
    %531 = vector.extract_strided_slice %504 {offsets = [0, 5, 0], sizes = [1, 16, 16], strides = [1, 1, 1]} : vector<1x22x16xf32> to vector<1x16x16xf32>
    %532 = vector.broadcast %530 : f32 to vector<1x16x16xf32>
    %533 = arith.mulf %532, %531 : vector<1x16x16xf32>
    %534 = arith.addf %529, %533 : vector<1x16x16xf32>
    %c97 = arith.constant 97 : index
    %535 = memref.load %arg2[%c97] : memref<98xf32, #tpu.memory_space<smem>>
    %536 = vector.extract_strided_slice %504 {offsets = [0, 6, 0], sizes = [1, 16, 16], strides = [1, 1, 1]} : vector<1x22x16xf32> to vector<1x16x16xf32>
    %537 = vector.broadcast %535 : f32 to vector<1x16x16xf32>
    %538 = arith.mulf %537, %536 : vector<1x16x16xf32>
    %539 = arith.addf %534, %538 : vector<1x16x16xf32>
    %cst_8 = arith.constant 0.000000e+00 : f32
    %540 = vector.broadcast %cst_8 : f32 to vector<1x16x16xf32>
    %541 = arith.subf %540, %539 : vector<1x16x16xf32>
    %542 = math.exp %541 : vector<1x16x16xf32>
    %cst_9 = arith.constant 1.000000e+00 : f32
    %543 = vector.broadcast %cst_9 : f32 to vector<1x16x16xf32>
    %544 = arith.addf %543, %542 : vector<1x16x16xf32>
    %cst_10 = arith.constant 1.000000e+00 : f32
    %545 = vector.broadcast %cst_10 : f32 to vector<1x16x16xf32>
    %546 = arith.divf %545, %544 : vector<1x16x16xf32>
    %547 = vector.shape_cast %546 : vector<1x16x16xf32> to vector<1x1x256xf32>
    %548 = vector.broadcast %547 : vector<1x1x256xf32> to vector<1x4x256xf32>
    %549 = arith.mulf %0, %548 : vector<1x4x256xf32>
    %c0_11 = arith.constant 0 : index
    %c0_12 = arith.constant 0 : index
    %c0_13 = arith.constant 0 : index
    %550 = vector.load %arg4[%c0_11, %c0_12, %c0_13] : memref<1x4x256xf32, #tpu.memory_space<vmem>>, vector<1x4x256xf32>
    tpu.vector_store %arg4[%c0_11, %c0_12, %c0_13], %549 {strides = array<i32>} : memref<1x4x256xf32, #tpu.memory_space<vmem>>, vector<1x4x256xf32>,
    return
  }
  func.func @transform_0(%arg0: i32) -> (i32, i32, i32) {
    %c0_i32 = arith.constant 0 : i32
    %c0_i32_0 = arith.constant 0 : i32
    %c0_i32_1 = arith.constant 0 : i32
    return %arg0, %c0_i32, %c0_i32_0 : i32, i32, i32
  }
  func.func @transform_1(%arg0: i32) -> i32 {
    %c0_i32 = arith.constant 0 : i32
    %c0_i32_0 = arith.constant 0 : i32
    return %c0_i32 : i32
  }
  func.func @transform_2(%arg0: i32) -> i32 {
    %c0_i32 = arith.constant 0 : i32
    %c0_i32_0 = arith.constant 0 : i32
    return %c0_i32 : i32
  }
  func.func @transform_3(%arg0: i32) -> (i32, i32, i32) {
    %c0_i32 = arith.constant 0 : i32
    %c0_i32_0 = arith.constant 0 : i32
    %c0_i32_1 = arith.constant 0 : i32
    return %arg0, %c0_i32, %c0_i32_0 : i32, i32, i32
  }
}

</mosaic_0001>

<llo_original>
// kernel: tpu_custom_call.1
$region0: #{tpu_custom_call.1}
  #allocation0 [shape = 'u32[]', space=smem, size = 0x4, offset = 0x4, fixed_abs, tag = 'smem constant byte address 0x4 - core index']
  #allocation1 [shape = 'u32[144,128]{1,0:T(1,128)}', space=vmem, size = 0x12000, scoped, tag = 'internal scratch']
  #allocation2 [shape = 'f32[1]{0:T(128)S(6)}', space=smem, size = 0x200, scoped, tag = 'scoped memory for tpu_custom_call.1']
  %s0 = inlined_call_operand.hbm [shape: f32[2,4,256], index: 0, kind: input, shape index: {}]
  %s1 = inlined_call_operand.vmem [shape: f32[98], index: 1, kind: input, shape index: {}]
  %s2 = inlined_call_operand.<no memory space> [shape: f32[1], index: 2, kind: input, shape index: {}]
  %s3 = inlined_call_operand.hbm [shape: f32[2,4,256], index: 3, kind: output, shape index: {}]
  %s4 = sld [smem:[#allocation0]]
  $region53: #{tpu_custom_call.1} parent=0
    _
  %s6 = ssub.s32 1, %s4
  %s7 = scalar_select 0, %s6, %s4
  %8 = sst [smem:[#allocation2]] %s2
  $region1: #{tpu_custom_call.1} parent=0
    #allocation3 [shape = 'u8[8192]{0}', space=vmem, size = 0x2000, scoped, tag = 'input window, operand 0']
    #allocation4 [shape = 's32[2]{0}', space=sflag, size = 0x8, scoped, tag = 'scoped memory for tpu_custom_call.1']
    #allocation5 [shape = 's32[2]{0}', space=sflag, size = 0x8, scoped, tag = 'scoped memory for tpu_custom_call.1']
    #allocation6 [shape = 's32[2]{0}', space=sflag, size = 0x8, scoped, tag = 'scoped memory for tpu_custom_call.1']
    #allocation7 [shape = 'u8[512]{0}', space=smem, size = 0x200, scoped, tag = 'input window, operand 1, single buffered']
    #allocation8 [shape = 'u8[8192]{0}', space=vmem, size = 0x2000, scoped, tag = 'output window, operand 0']
    %9 = vsyncpa [#allocation4], 0
    %s10 = scalar_lea.sflag [#allocation4], 1
    %11 = vsyncpa %s10, 0
    %12 = vsyncpa [#allocation6], 0
    %13 = vsyncpa [#allocation5], 0
    %s14 = scalar_lea.sflag [#allocation5], 1
    %15 = vsyncpa %s14, 0
    loop: start=0, step=1, limit=4
    $region2: #{tpu_custom_call.1} parent=1 // loop_pre_header
      _
    $region3: #{tpu_custom_call.1} parent=1 // loop_header
      %s17 = sphi 0, %s21
      %p18 = scmp.ge.s32.totalorder %s17, 4
      %s27 = sphi 0, %s29
      %s30 = sphi 0, %s27
      %s31 = sphi 0, %s30
      %s47 = sphi 0, %s31
      %s51 = sphi 0, %s51
      %s53 = sphi 0, %s51
      %s54 = sphi 0, %s53
      %s68 = sphi 0, %s54
      %s72 = sphi 0, %s72
      %s74 = sphi 0, %s72
      %s75 = sphi 0, %s74
      %s89 = sphi 0, %s75
      %s95 = sphi 0, %s97
      %s98 = sphi 0, %s95
      %s99 = sphi 0, %s98
      %s115 = sphi 0, %s99
    $region4: #{tpu_custom_call.1} parent=1 // loop_header_branch
      %20 = sbr.rel (%p18) target = $region8
    $region5: #{tpu_custom_call.1} parent=1 // loop_body
      %s22 = ssub.s32 %s17, 1
      %s23 = ssub.s32 %s17, 2
      %s24 = sadd.s32 %s17, 1
      %s25 = ssub.s32 %s17, %s24
      %p26 = scmp.eq.s32.totalorder %s25, 0
      %s28 = sadd.s32 %s27, 1
      %s29 = scalar_select %p26, %s27, %s28
      %p32 = pneg %p26
      %p33 = scmp.eq.s32.totalorder %s17, 1
      %p34 = por %p32, %p33
      %p35 = scmp.ne.s32.totalorder %s27, %s30
      %p36 = scmp.eq.s32.totalorder %s17, 0
      %p37 = por %p35, %p36
      %p38 = scmp.ne.s32.totalorder %s27, %s30
      %p39 = scmp.eq.s32.totalorder %s22, 1
      %p40 = por %p38, %p39
      %p41 = scmp.ne.s32.totalorder %s30, %s31
      %p42 = scmp.eq.s32.totalorder %s22, 0
      %p43 = por %p41, %p42
      %p44 = scmp.ne.s32.totalorder %s30, %s31
      %p45 = scmp.eq.s32.totalorder %s23, 1
      %p46 = por %p44, %p45
      %p48 = scmp.ne.s32.totalorder %s31, %s47
      %p49 = scmp.eq.s32.totalorder %s23, 0
      %p50 = por %p48, %p49
      %s52 = sadd.s32 %s51, 1
      %p55 = scmp.eq.s32.totalorder %s17, 1
      %p56 = scmp.ne.s32.totalorder %s51, %s53
      %p57 = scmp.eq.s32.totalorder %s17, 0
      %p58 = por %p56, %p57
      %p59 = scmp.ne.s32.totalorder %s51, %s53
      %p60 = scmp.eq.s32.totalorder %s22, 1
      %p61 = por %p59, %p60
      %p62 = scmp.ne.s32.totalorder %s53, %s54
      %p63 = scmp.eq.s32.totalorder %s22, 0
      %p64 = por %p62, %p63
      %p65 = scmp.ne.s32.totalorder %s53, %s54
      %p66 = scmp.eq.s32.totalorder %s23, 1
      %p67 = por %p65, %p66
      %p69 = scmp.ne.s32.totalorder %s54, %s68
      %p70 = scmp.eq.s32.totalorder %s23, 0
      %p71 = por %p69, %p70
      %s73 = sadd.s32 %s72, 1
      %p76 = scmp.eq.s32.totalorder %s17, 1
      %p77 = scmp.ne.s32.totalorder %s72, %s74
      %p78 = scmp.eq.s32.totalorder %s17, 0
      %p79 = por %p77, %p78
      %p80 = scmp.ne.s32.totalorder %s72, %s74
      %p81 = scmp.eq.s32.totalorder %s22, 1
      %p82 = por %p80, %p81
      %p83 = scmp.ne.s32.totalorder %s74, %s75
      %p84 = scmp.eq.s32.totalorder %s22, 0
      %p85 = por %p83, %p84
      %p86 = scmp.ne.s32.totalorder %s74, %s75
      %p87 = scmp.eq.s32.totalorder %s23, 1
      %p88 = por %p86, %p87
      %p90 = scmp.ne.s32.totalorder %s75, %s89
      %p91 = scmp.eq.s32.totalorder %s23, 0
      %p92 = por %p90, %p91
      %s93 = ssub.s32 %s17, %s24
      %p94 = scmp.eq.s32.totalorder %s93, 0
      %s96 = sadd.s32 %s95, 1
      %s97 = scalar_select %p94, %s95, %s96
      %p100 = pneg %p94
      %p101 = scmp.eq.s32.totalorder %s17, 1
      %p102 = por %p100, %p101
      %p103 = scmp.ne.s32.totalorder %s95, %s98
      %p104 = scmp.eq.s32.totalorder %s17, 0
      %p105 = por %p103, %p104
      %p106 = scmp.ne.s32.totalorder %s95, %s98
      %p107 = scmp.eq.s32.totalorder %s22, 1
      %p108 = por %p106, %p107
      %p109 = scmp.ne.s32.totalorder %s98, %s99
      %p110 = scmp.eq.s32.totalorder %s22, 0
      %p111 = por %p109, %p110
      %p112 = scmp.ne.s32.totalorder %s98, %s99
      %p113 = scmp.eq.s32.totalorder %s23, 1
      %p114 = por %p112, %p113
      %p116 = scmp.ne.s32.totalorder %s99, %s115
      %p117 = scmp.eq.s32.totalorder %s23, 0
      %p118 = por %p116, %p117
      %p119 = scmp.le.s32.totalorder 1, %s17
      %p120 = scmp.lt.s32.totalorder %s17, 3
      %p121 = pnand %p119, %p120
      %p122 = pneg %p121
      // Predicated region
      $region9: #{tpu_custom_call.1} parent=5 // pred_check
        _
      $region10: #{tpu_custom_call.1} parent=5 // pred_check_branch
        %124 = sbr.rel (%p121) target = $region12
      $region11: #{tpu_custom_call.1} parent=5 // pred_region
        %s125 = ssub.s32 %s17, 1
        // Predicated region
        $region13: #{tpu_custom_call.1} parent=11 // pred_check
          %p126 = pneg %p64
        $region14: #{tpu_custom_call.1} parent=11 // pred_check_branch
          %128 = sbr.rel (%p126) target = $region16
        $region15: #{tpu_custom_call.1} parent=11 // pred_region
          %s130 = ssub.s32 16, 16
          %131 = vsyncadd [#allocation6], %s130
          %s133 = sshll.u32 %s1, 4
          %s134 = int_to_ptr.vmem [resolvable:$true] %s133
          %136 = dma.vmem_to_smem %s134, 16, [#allocation7], [#allocation6]
        $region16: #{tpu_custom_call.1} parent=11 // pred_fallthru
          _
        // Predicated region
        $region17: #{tpu_custom_call.1} parent=11 // pred_check
          %p137 = pneg %p85
        $region18: #{tpu_custom_call.1} parent=11 // pred_check_branch
          %139 = sbr.rel (%p137) target = $region20
        $region19: #{tpu_custom_call.1} parent=11 // pred_region
          _
        $region20: #{tpu_custom_call.1} parent=11 // pred_fallthru
          _
      $region12: #{tpu_custom_call.1} parent=5 // pred_fallthru
        _
      %p140 = scmp.lt.s32.totalorder %s17, 2
      // Predicated region
      $region21: #{tpu_custom_call.1} parent=5 // pred_check
        %p141 = pneg %p140
      $region22: #{tpu_custom_call.1} parent=5 // pred_check_branch
        %143 = sbr.rel (%p141) target = $region24
      $region23: #{tpu_custom_call.1} parent=5 // pred_region
        // Predicated region
        $region25: #{tpu_custom_call.1} parent=23 // pred_check
          %p144 = pneg %p37
        $region26: #{tpu_custom_call.1} parent=23 // pred_check_branch
          %146 = sbr.rel (%p144) target = $region28
        $region27: #{tpu_custom_call.1} parent=23 // pred_region
          %s147 = sand.u32 %s27, 1
          %s148 = scalar_lea.sflag [#allocation4], %s147
          %s149 = sand.u32 %s27, 1
          %s150 = smul.addr %s149, 8
          %s151 = scalar_lea.vmem [#allocation3], %s150
          %s153 = ssub.s32 128, 128
          %154 = vsyncadd %s148, %s153
          %s155 = smul.addr %s17, 2
          %s156 = smul.addr %s155, 64
          %s157 = scalar_lea.hbm %s0, %s156
          %s159 = sshll.u32 %s151, 4
          %s160 = int_to_ptr.vmem [resolvable:$true] %s159
          %162 = dma.hbm_to_vmem [thread:$0]  %s157, 128, %s160, %s148
        $region28: #{tpu_custom_call.1} parent=23 // pred_fallthru
          _
      $region24: #{tpu_custom_call.1} parent=5 // pred_fallthru
        _
      %p163 = scmp.le.s32.totalorder 1, %s17
      %p164 = scmp.lt.s32.totalorder %s17, 3
      %p165 = pnand %p163, %p164
      %p166 = pneg %p165
      // Predicated region
      $region29: #{tpu_custom_call.1} parent=5 // pred_check
        _
      $region30: #{tpu_custom_call.1} parent=5 // pred_check_branch
        %168 = sbr.rel (%p165) target = $region32
      $region31: #{tpu_custom_call.1} parent=5 // pred_region
        %s169 = ssub.s32 %s17, 1
        %s170 = sand.u32 %s30, 1
        %s171 = scalar_lea.sflag [#allocation4], %s170
        %s172 = sand.u32 %s30, 1
        %s173 = smul.addr %s172, 8
        %s174 = scalar_lea.vmem [#allocation3], %s173
        // Predicated region
        $region33: #{tpu_custom_call.1} parent=31 // pred_check
          %p175 = pneg %p43
        $region34: #{tpu_custom_call.1} parent=31 // pred_check_branch
          %177 = sbr.rel (%p175) target = $region36
        $region35: #{tpu_custom_call.1} parent=31 // pred_region
          %178 = dma.done %s171, 128
        $region36: #{tpu_custom_call.1} parent=31 // pred_fallthru
          _
        // Predicated region
        $region37: #{tpu_custom_call.1} parent=31 // pred_check
          %p179 = pneg %p64
        $region38: #{tpu_custom_call.1} parent=31 // pred_check_branch
          %181 = sbr.rel (%p179) target = $region40
        $region39: #{tpu_custom_call.1} parent=31 // pred_region
          %182 = dma.done [#allocation6], 16
        $region40: #{tpu_custom_call.1} parent=31 // pred_fallthru
          _
        %183 = sfence
        %s184 = sand.u32 %s30, 1
        %s185 = scalar_lea.sflag [#allocation4], %s184
        %s186 = sand.u32 %s30, 1
        %s187 = smul.addr %s186, 8
        %s188 = scalar_lea.vmem [#allocation3], %s187
        %p189 = pneg %p43
        %p190 = pneg %p40
        %p191 = pneg %p64
        %p192 = pneg %p61
        %p193 = pneg %p85
        %p194 = pneg %p82
        %p195 = pneg %p111
        %p196 = pneg %p108
        %s197 = sand.u32 %s98, 1
        %s198 = scalar_lea.sflag [#allocation5], %s197
        %s199 = sand.u32 %s98, 1
        %s200 = smul.addr %s199, 8
        %s201 = scalar_lea.vmem [#allocation8], %s200
        %v202 = vld [vmem:[%s174] sm:$0xff]
        %v204 = vcombine.high %v202, %v202
        %vm206 = vcmask 1043456
        %v207 = vsel %vm206, %v202, -inf
        %v208 = vrot.slane %v207, 4
        %v209 = vmax.f32 %v207, %v208
        %v210 = vrot.slane %v209, 2
        %v211 = vmax.f32 %v209, %v210
        %v212 = vrot.slane %v211, 1
        %v213 = vmax.f32 %v211, %v212
        %v214 = vsel %vm206, %v204, -inf
        %v215 = vrot.slane %v214, 4
        %v216 = vmax.f32 %v214, %v215
        %v217 = vrot.slane %v216, 2
        %v218 = vmax.f32 %v216, %v217
        %v219 = vrot.slane %v218, 1
        %v220 = vmax.f32 %v218, %v219
        %v221 = vsel %vm206, %v202, 0.0
        %v222 = vrot.slane %v221, 4
        %v223 = vadd.f32 %v221, %v222
        %v224 = vrot.slane %v223, 2
        %v225 = vadd.f32 %v223, %v224
        %v226 = vrot.slane %v225, 1
        %v227 = vadd.f32 %v225, %v226
        %v228 = vsel %vm206, %v204, 0.0
        %v229 = vrot.slane %v228, 4
        %v230 = vadd.f32 %v228, %v229
        %v231 = vrot.slane %v230, 2
        %v232 = vadd.f32 %v230, %v231
        %v233 = vrot.slane %v232, 1
        %v234 = vadd.f32 %v232, %v233
        %v235 = vmul.f32 %v227, 0.25
        %v236 = vmul.f32 %v234, 0.25
        %vm237 = vcmask 1040384
        %v238 = vsel %vm237, %v213, %v235
        %v239 = vsel %vm237, %v220, %v236
        %241 = vrot.lane.b32.xlu0 %v238, 112
        %v242 = vpop.permute.xlu0 %241
        %244 = vrot.lane.b32.xlu0 %v238, 96
        %v245 = vpop.permute.xlu0 %244
        %247 = vrot.lane.b32.xlu0 %v238, 80
        %v248 = vpop.permute.xlu0 %247
        %250 = vrot.lane.b32.xlu0 %v238, 64
        %v251 = vpop.permute.xlu0 %250
        %253 = vrot.lane.b32.xlu0 %v238, 48
        %v254 = vpop.permute.xlu0 %253
        %256 = vrot.lane.b32.xlu0 %v238, 32
        %v257 = vpop.permute.xlu0 %256
        %259 = vrot.lane.b32.xlu0 %v238, 16
        %v260 = vpop.permute.xlu0 %259
        %263 = vrot.lane.b32.xlu0 %v239, 112
        %v264 = vpop.permute.xlu0 %263
        %266 = vrot.lane.b32.xlu0 %v239, 96
        %v267 = vpop.permute.xlu0 %266
        %269 = vrot.lane.b32.xlu0 %v239, 80
        %v270 = vpop.permute.xlu0 %269
        %272 = vrot.lane.b32.xlu0 %v239, 64
        %v273 = vpop.permute.xlu0 %272
        %275 = vrot.lane.b32.xlu0 %v239, 48
        %v276 = vpop.permute.xlu0 %275
        %278 = vrot.lane.b32.xlu0 %v239, 32
        %v279 = vpop.permute.xlu0 %278
        %281 = vrot.lane.b32.xlu0 %v239, 16
        %v282 = vpop.permute.xlu0 %281
        %v284 = vcombine.low %v238, %v245
        %v286 = vunpack.c.l.s4 1983009808
        %v287 = vunpack.c.0.s8 %v286
        %v288 = vlaneseq
        %v289 = vshrl.u32 %v288, 7
        %v290 = vsub.s32 %v287, %v289
        %v291 = vrot.slane %v284, %v290
        %v292 = vcombine.low %v242, %v248
        %v294 = vunpack.c.l.s4 1983009808
        %v295 = vunpack.c.0.s8 %v294
        %v296 = vlaneseq
        %v297 = vshrl.u32 %v296, 7
        %v298 = vsub.s32 %v295, %v297
        %v299 = vrot.slane %v292, %v298
        %v300 = vcombine.low %v251, %v257
        %v302 = vunpack.c.l.s4 1983009808
        %v303 = vunpack.c.0.s8 %v302
        %v304 = vlaneseq
        %v305 = vshrl.u32 %v304, 7
        %v306 = vsub.s32 %v303, %v305
        %v307 = vrot.slane %v300, %v306
        %v308 = vcombine.low %v254, %v260
        %v310 = vunpack.c.l.s4 1983009808
        %v311 = vunpack.c.0.s8 %v310
        %v312 = vlaneseq
        %v313 = vshrl.u32 %v312, 7
        %v314 = vsub.s32 %v311, %v313
        %v315 = vrot.slane %v308, %v314
        %v316 = vcombine.low %v291, %v299
        %v318 = vunpack.c.l.s4 1934713408
        %v319 = vunpack.c.0.s8 %v318
        %v320 = vlaneseq
        %v321 = vshrl.u32 %v320, 7
        %v322 = vsub.s32 %v319, %v321
        %v323 = vrot.slane %v316, %v322
        %v324 = vcombine.low %v307, %v315
        %v326 = vunpack.c.l.s4 1934713408
        %v327 = vunpack.c.0.s8 %v326
        %v328 = vlaneseq
        %v329 = vshrl.u32 %v328, 7
        %v330 = vsub.s32 %v327, %v329
        %v331 = vrot.slane %v324, %v330
        %v332 = vcombine.low %v323, %v331
        %v333 = vcombine.high %v323, %v331
        %v334 = vcombine.low %v239, %v267
        %v336 = vunpack.c.l.s4 1983009808
        %v337 = vunpack.c.0.s8 %v336
        %v338 = vlaneseq
        %v339 = vshrl.u32 %v338, 7
        %v340 = vsub.s32 %v337, %v339
        %v341 = vrot.slane %v334, %v340
        %v342 = vcombine.low %v264, %v270
        %v344 = vunpack.c.l.s4 1983009808
        %v345 = vunpack.c.0.s8 %v344
        %v346 = vlaneseq
        %v347 = vshrl.u32 %v346, 7
        %v348 = vsub.s32 %v345, %v347
        %v349 = vrot.slane %v342, %v348
        %v350 = vcombine.low %v273, %v279
        %v352 = vunpack.c.l.s4 1983009808
        %v353 = vunpack.c.0.s8 %v352
        %v354 = vlaneseq
        %v355 = vshrl.u32 %v354, 7
        %v356 = vsub.s32 %v353, %v355
        %v357 = vrot.slane %v350, %v356
        %v358 = vcombine.low %v276, %v282
        %v360 = vunpack.c.l.s4 1983009808
        %v361 = vunpack.c.0.s8 %v360
        %v362 = vlaneseq
        %v363 = vshrl.u32 %v362, 7
        %v364 = vsub.s32 %v361, %v363
        %v365 = vrot.slane %v358, %v364
        %v366 = vcombine.low %v341, %v349
        %v368 = vunpack.c.l.s4 1934713408
        %v369 = vunpack.c.0.s8 %v368
        %v370 = vlaneseq
        %v371 = vshrl.u32 %v370, 7
        %v372 = vsub.s32 %v369, %v371
        %v373 = vrot.slane %v366, %v372
        %v374 = vcombine.low %v357, %v365
        %v376 = vunpack.c.l.s4 1934713408
        %v377 = vunpack.c.0.s8 %v376
        %v378 = vlaneseq
        %v379 = vshrl.u32 %v378, 7
        %v380 = vsub.s32 %v377, %v379
        %v381 = vrot.slane %v374, %v380
        %v382 = vcombine.low %v373, %v381
        %v383 = vcombine.high %v373, %v381
        %vm388 = vcmask 1042432
        %v389 = vrot.slane %v332, 5
        %v390 = vrot.slane %v382, 5
        %v391 = vsel %vm388, %v389, %v390
        %v392 = vrot.slane %v333, 5
        %v393 = vrot.slane %v383, 5
        %v394 = vsel %vm388, %v392, %v393
        %v399 = vsel %vm388, 0.0, %v389
        %v400 = vsel %vm388, 0.0, %v392
        %v401 = vsel %vm388, %v390, 0.0
        %v402 = vsel %vm388, %v393, 0.0
        %407 = vrot.lane.b32.xlu0 %v399, 3
        %v408 = vpop.permute.xlu0 %407
        %409 = vrot.lane.b32.xlu0 %v391, 3
        %v410 = vpop.permute.xlu0 %409
        %411 = vrot.lane.b32.xlu0 %v401, 3
        %v412 = vpop.permute.xlu0 %411
        %413 = vrot.lane.b32.xlu0 %v400, 3
        %v414 = vpop.permute.xlu0 %413
        %415 = vrot.lane.b32.xlu0 %v394, 3
        %v416 = vpop.permute.xlu0 %415
        %417 = vrot.lane.b32.xlu0 %v402, 3
        %v418 = vpop.permute.xlu0 %417
        %vm425 = vcmask 23552
        %v426 = vsel %vm425, 0.0, %v408
        %v427 = vsel %vm425, 0.0, %v410
        %v428 = vsel %vm425, 0.0, %v412
        %v429 = vsel %vm425, 0.0, %v414
        %v430 = vsel %vm425, 0.0, %v416
        %v431 = vsel %vm425, 0.0, %v418
        %vm432 = vcmask 154624
        %v433 = vsel %vm432, %v426, 0.0
        %v434 = vsel %vm432, %v427, 0.0
        %v435 = vsel %vm432, %v428, 0.0
        %v436 = vsel %vm432, %v429, 0.0
        %v437 = vsel %vm432, %v430, 0.0
        %v438 = vsel %vm432, %v431, 0.0
        %s439 = sld [smem:[#allocation2]]
        %v440 = vstv %s439
        %s441 = sld [smem:[#allocation7]]
        %v442 = vstv %s441
        %v443 = vmul.f32 %v442, %v433
        %v444 = vmul.f32 %v442, %v434
        %v445 = vadd.f32 %v440, %v443
        %v446 = vadd.f32 %v440, %v444
        %s447 = sld [smem:[#allocation7 + $0x7]]
        %v448 = vstv %s447
        %v449 = vmul.f32 %v448, %v433
        %v450 = vmul.f32 %v448, %v434
        %v451 = vmul.f32 %v448, %v435
        %vm455 = vcmask 1046528
        %v456 = vrot.slane %v449, 1
        %v457 = vrot.slane %v450, 1
        %v458 = vsel %vm455, %v456, %v457
        %v459 = vrot.slane %v451, 1
        %v460 = vsel %vm455, %v457, %v459
        %v463 = vadd.f32 %v445, %v458
        %v464 = vadd.f32 %v446, %v460
        %s465 = sld [smem:[#allocation7 + $0xe]]
        %v466 = vstv %s465
        %v467 = vmul.f32 %v466, %v433
        %v468 = vmul.f32 %v466, %v434
        %v469 = vmul.f32 %v466, %v435
        %vm473 = vcmask 1045504
        %v474 = vrot.slane %v467, 2
        %v475 = vrot.slane %v468, 2
        %v476 = vsel %vm473, %v474, %v475
        %v477 = vrot.slane %v469, 2
        %v478 = vsel %vm473, %v475, %v477
        %v481 = vadd.f32 %v463, %v476
        %v482 = vadd.f32 %v464, %v478
        %s483 = sld [smem:[#allocation7 + $0x15]]
        %v484 = vstv %s483
        %v485 = vmul.f32 %v484, %v433
        %v486 = vmul.f32 %v484, %v434
        %v487 = vmul.f32 %v484, %v435
        %vm491 = vcmask 1044480
        %v492 = vrot.slane %v485, 3
        %v493 = vrot.slane %v486, 3
        %v494 = vsel %vm491, %v492, %v493
        %v495 = vrot.slane %v487, 3
        %v496 = vsel %vm491, %v493, %v495
        %v499 = vadd.f32 %v481, %v494
        %v500 = vadd.f32 %v482, %v496
        %s501 = sld [smem:[#allocation7 + $0x1c]]
        %v502 = vstv %s501
        %v503 = vmul.f32 %v502, %v433
        %v504 = vmul.f32 %v502, %v434
        %v505 = vmul.f32 %v502, %v435
        %v509 = vrot.slane %v503, 4
        %v510 = vrot.slane %v504, 4
        %v511 = vsel %vm206, %v509, %v510
        %v512 = vrot.slane %v505, 4
        %v513 = vsel %vm206, %v510, %v512
        %v516 = vadd.f32 %v499, %v511
        %v517 = vadd.f32 %v500, %v513
        %s518 = sld [smem:[#allocation7 + $0x23]]
        %v519 = vstv %s518
        %v520 = vmul.f32 %v519, %v433
        %v521 = vmul.f32 %v519, %v434
        %v522 = vmul.f32 %v519, %v435
        %v526 = vrot.slane %v520, 5
        %v527 = vrot.slane %v521, 5
        %v528 = vsel %vm388, %v526, %v527
        %v529 = vrot.slane %v522, 5
        %v530 = vsel %vm388, %v527, %v529
        %v533 = vadd.f32 %v516, %v528
        %v534 = vadd.f32 %v517, %v530
        %s535 = sld [smem:[#allocation7 + $0x2a]]
        %v536 = vstv %s535
        %v537 = vmul.f32 %v536, %v433
        %v538 = vmul.f32 %v536, %v434
        %v539 = vmul.f32 %v536, %v435
        %vm543 = vcmask 1041408
        %v544 = vrot.slane %v537, 6
        %v545 = vrot.slane %v538, 6
        %v546 = vsel %vm543, %v544, %v545
        %v547 = vrot.slane %v539, 6
        %v548 = vsel %vm543, %v545, %v547
        %v551 = vadd.f32 %v533, %v546
        %v552 = vadd.f32 %v534, %v548
        %s553 = sld [smem:[#allocation7 + $0x31]]
        %v554 = vstv %s553
        %v555 = vmul.f32 %v554, %v436
        %v556 = vmul.f32 %v554, %v437
        %v557 = vadd.f32 %v551, %v555
        %v558 = vadd.f32 %v552, %v556
        %s559 = sld [smem:[#allocation7 + $0x38]]
        %v560 = vstv %s559
        %v561 = vmul.f32 %v560, %v436
        %v562 = vmul.f32 %v560, %v437
        %v563 = vmul.f32 %v560, %v438
        %v567 = vrot.slane %v561, 1
        %v568 = vrot.slane %v562, 1
        %v569 = vsel %vm455, %v567, %v568
        %v570 = vrot.slane %v563, 1
        %v571 = vsel %vm455, %v568, %v570
        %v574 = vadd.f32 %v557, %v569
        %v575 = vadd.f32 %v558, %v571
        %s576 = sld [smem:[#allocation7 + $0x3f]]
        %v577 = vstv %s576
        %v578 = vmul.f32 %v577, %v436
        %v579 = vmul.f32 %v577, %v437
        %v580 = vmul.f32 %v577, %v438
        %v584 = vrot.slane %v578, 2
        %v585 = vrot.slane %v579, 2
        %v586 = vsel %vm473, %v584, %v585
        %v587 = vrot.slane %v580, 2
        %v588 = vsel %vm473, %v585, %v587
        %v591 = vadd.f32 %v574, %v586
        %v592 = vadd.f32 %v575, %v588
        %s593 = sld [smem:[#allocation7 + $0x46]]
        %v594 = vstv %s593
        %v595 = vmul.f32 %v594, %v436
        %v596 = vmul.f32 %v594, %v437
        %v597 = vmul.f32 %v594, %v438
        %v601 = vrot.slane %v595, 3
        %v602 = vrot.slane %v596, 3
        %v603 = vsel %vm491, %v601, %v602
        %v604 = vrot.slane %v597, 3
        %v605 = vsel %vm491, %v602, %v604
        %v608 = vadd.f32 %v591, %v603
        %v609 = vadd.f32 %v592, %v605
        %s610 = sld [smem:[#allocation7 + $0x4d]]
        %v611 = vstv %s610
        %v612 = vmul.f32 %v611, %v436
        %v613 = vmul.f32 %v611, %v437
        %v614 = vmul.f32 %v611, %v438
        %v618 = vrot.slane %v612, 4
        %v619 = vrot.slane %v613, 4
        %v620 = vsel %vm206, %v618, %v619
        %v621 = vrot.slane %v614, 4
        %v622 = vsel %vm206, %v619, %v621
        %v625 = vadd.f32 %v608, %v620
        %v626 = vadd.f32 %v609, %v622
        %s627 = sld [smem:[#allocation7 + $0x54]]
        %v628 = vstv %s627
        %v629 = vmul.f32 %v628, %v436
        %v630 = vmul.f32 %v628, %v437
        %v631 = vmul.f32 %v628, %v438
        %v635 = vrot.slane %v629, 5
        %v636 = vrot.slane %v630, 5
        %v637 = vsel %vm388, %v635, %v636
        %v638 = vrot.slane %v631, 5
        %v639 = vsel %vm388, %v636, %v638
        %v642 = vadd.f32 %v625, %v637
        %v643 = vadd.f32 %v626, %v639
        %s644 = sld [smem:[#allocation7 + $0x5b]]
        %v645 = vstv %s644
        %v646 = vmul.f32 %v645, %v436
        %v647 = vmul.f32 %v645, %v437
        %v648 = vmul.f32 %v645, %v438
        %v652 = vrot.slane %v646, 6
        %v653 = vrot.slane %v647, 6
        %v654 = vsel %vm543, %v652, %v653
        %v655 = vrot.slane %v648, 6
        %v656 = vsel %vm543, %v653, %v655
        %v659 = vadd.f32 %v642, %v654
        %v660 = vadd.f32 %v643, %v656
        %s661 = sld [smem:[#allocation7 + $0x1]]
        %v662 = vstv %s661
        %v663 = vmul.f32 %v662, %v433
        %v664 = vmul.f32 %v662, %v434
        %667 = vrot.lane.b32.xlu0 %v663, 127
        %v668 = vpop.permute.xlu0 %667
        %669 = vrot.lane.b32.xlu0 %v664, 127
        %v670 = vpop.permute.xlu0 %669
        %v673 = vadd.f32 %v659, %v668
        %v674 = vadd.f32 %v660, %v670
        %s675 = sld [smem:[#allocation7 + $0x8]]
        %v676 = vstv %s675
        %v677 = vmul.f32 %v676, %v433
        %v678 = vmul.f32 %v676, %v434
        %v679 = vmul.f32 %v676, %v435
        %v683 = vrot.slane %v677, 1
        %v684 = vrot.slane %v678, 1
        %v685 = vsel %vm455, %v683, %v684
        %v686 = vrot.slane %v679, 1
        %v687 = vsel %vm455, %v684, %v686
        %688 = vrot.lane.b32.xlu0 %v685, 127
        %v689 = vpop.permute.xlu0 %688
        %690 = vrot.lane.b32.xlu0 %v687, 127
        %v691 = vpop.permute.xlu0 %690
        %v694 = vadd.f32 %v673, %v689
        %v695 = vadd.f32 %v674, %v691
        %s696 = sld [smem:[#allocation7 + $0xf]]
        %v697 = vstv %s696
        %v698 = vmul.f32 %v697, %v433
        %v699 = vmul.f32 %v697, %v434
        %v700 = vmul.f32 %v697, %v435
        %v704 = vrot.slane %v698, 2
        %v705 = vrot.slane %v699, 2
        %v706 = vsel %vm473, %v704, %v705
        %v707 = vrot.slane %v700, 2
        %v708 = vsel %vm473, %v705, %v707
        %709 = vrot.lane.b32.xlu0 %v706, 127
        %v710 = vpop.permute.xlu0 %709
        %711 = vrot.lane.b32.xlu0 %v708, 127
        %v712 = vpop.permute.xlu0 %711
        %v715 = vadd.f32 %v694, %v710
        %v716 = vadd.f32 %v695, %v712
        %s717 = sld [smem:[#allocation7 + $0x16]]
        %v718 = vstv %s717
        %v719 = vmul.f32 %v718, %v433
        %v720 = vmul.f32 %v718, %v434
        %v721 = vmul.f32 %v718, %v435
        %v725 = vrot.slane %v719, 3
        %v726 = vrot.slane %v720, 3
        %v727 = vsel %vm491, %v725, %v726
        %v728 = vrot.slane %v721, 3
        %v729 = vsel %vm491, %v726, %v728
        %730 = vrot.lane.b32.xlu0 %v727, 127
        %v731 = vpop.permute.xlu0 %730
        %732 = vrot.lane.b32.xlu0 %v729, 127
        %v733 = vpop.permute.xlu0 %732
        %v736 = vadd.f32 %v715, %v731
        %v737 = vadd.f32 %v716, %v733
        %s738 = sld [smem:[#allocation7 + $0x1d]]
        %v739 = vstv %s738
        %v740 = vmul.f32 %v739, %v433
        %v741 = vmul.f32 %v739, %v434
        %v742 = vmul.f32 %v739, %v435
        %v746 = vrot.slane %v740, 4
        %v747 = vrot.slane %v741, 4
        %v748 = vsel %vm206, %v746, %v747
        %v749 = vrot.slane %v742, 4
        %v750 = vsel %vm206, %v747, %v749
        %751 = vrot.lane.b32.xlu0 %v748, 127
        %v752 = vpop.permute.xlu0 %751
        %753 = vrot.lane.b32.xlu0 %v750, 127
        %v754 = vpop.permute.xlu0 %753
        %v757 = vadd.f32 %v736, %v752
        %v758 = vadd.f32 %v737, %v754
        %s759 = sld [smem:[#allocation7 + $0x24]]
        %v760 = vstv %s759
        %v761 = vmul.f32 %v760, %v433
        %v762 = vmul.f32 %v760, %v434
        %v763 = vmul.f32 %v760, %v435
        %v767 = vrot.slane %v761, 5
        %v768 = vrot.slane %v762, 5
        %v769 = vsel %vm388, %v767, %v768
        %v770 = vrot.slane %v763, 5
        %v771 = vsel %vm388, %v768, %v770
        %772 = vrot.lane.b32.xlu0 %v769, 127
        %v773 = vpop.permute.xlu0 %772
        %774 = vrot.lane.b32.xlu0 %v771, 127
        %v775 = vpop.permute.xlu0 %774
        %v778 = vadd.f32 %v757, %v773
        %v779 = vadd.f32 %v758, %v775
        %s780 = sld [smem:[#allocation7 + $0x2b]]
        %v781 = vstv %s780
        %v782 = vmul.f32 %v781, %v433
        %v783 = vmul.f32 %v781, %v434
        %v784 = vmul.f32 %v781, %v435
        %v788 = vrot.slane %v782, 6
        %v789 = vrot.slane %v783, 6
        %v790 = vsel %vm543, %v788, %v789
        %v791 = vrot.slane %v784, 6
        %v792 = vsel %vm543, %v789, %v791
        %793 = vrot.lane.b32.xlu0 %v790, 127
        %v794 = vpop.permute.xlu0 %793
        %795 = vrot.lane.b32.xlu0 %v792, 127
        %v796 = vpop.permute.xlu0 %795
        %v799 = vadd.f32 %v778, %v794
        %v800 = vadd.f32 %v779, %v796
        %s801 = sld [smem:[#allocation7 + $0x32]]
        %v802 = vstv %s801
        %v803 = vmul.f32 %v802, %v436
        %v804 = vmul.f32 %v802, %v437
        %807 = vrot.lane.b32.xlu0 %v803, 127
        %v808 = vpop.permute.xlu0 %807
        %809 = vrot.lane.b32.xlu0 %v804, 127
        %v810 = vpop.permute.xlu0 %809
        %v813 = vadd.f32 %v799, %v808
        %v814 = vadd.f32 %v800, %v810
        %s815 = sld [smem:[#allocation7 + $0x39]]
        %v816 = vstv %s815
        %v817 = vmul.f32 %v816, %v436
        %v818 = vmul.f32 %v816, %v437
        %v819 = vmul.f32 %v816, %v438
        %v823 = vrot.slane %v817, 1
        %v824 = vrot.slane %v818, 1
        %v825 = vsel %vm455, %v823, %v824
        %v826 = vrot.slane %v819, 1
        %v827 = vsel %vm455, %v824, %v826
        %828 = vrot.lane.b32.xlu0 %v825, 127
        %v829 = vpop.permute.xlu0 %828
        %830 = vrot.lane.b32.xlu0 %v827, 127
        %v831 = vpop.permute.xlu0 %830
        %v834 = vadd.f32 %v813, %v829
        %v835 = vadd.f32 %v814, %v831
        %s836 = sld [smem:[#allocation7 + $0x40]]
        %v837 = vstv %s836
        %v838 = vmul.f32 %v837, %v436
        %v839 = vmul.f32 %v837, %v437
        %v840 = vmul.f32 %v837, %v438
        %v844 = vrot.slane %v838, 2
        %v845 = vrot.slane %v839, 2
        %v846 = vsel %vm473, %v844, %v845
        %v847 = vrot.slane %v840, 2
        %v848 = vsel %vm473, %v845, %v847
        %849 = vrot.lane.b32.xlu0 %v846, 127
        %v850 = vpop.permute.xlu0 %849
        %851 = vrot.lane.b32.xlu0 %v848, 127
        %v852 = vpop.permute.xlu0 %851
        %v855 = vadd.f32 %v834, %v850
        %v856 = vadd.f32 %v835, %v852
        %s857 = sld [smem:[#allocation7 + $0x47]]
        %v858 = vstv %s857
        %v859 = vmul.f32 %v858, %v436
        %v860 = vmul.f32 %v858, %v437
        %v861 = vmul.f32 %v858, %v438
        %v865 = vrot.slane %v859, 3
        %v866 = vrot.slane %v860, 3
        %v867 = vsel %vm491, %v865, %v866
        %v868 = vrot.slane %v861, 3
        %v869 = vsel %vm491, %v866, %v868
        %870 = vrot.lane.b32.xlu0 %v867, 127
        %v871 = vpop.permute.xlu0 %870
        %872 = vrot.lane.b32.xlu0 %v869, 127
        %v873 = vpop.permute.xlu0 %872
        %v876 = vadd.f32 %v855, %v871
        %v877 = vadd.f32 %v856, %v873
        %s878 = sld [smem:[#allocation7 + $0x4e]]
        %v879 = vstv %s878
        %v880 = vmul.f32 %v879, %v436
        %v881 = vmul.f32 %v879, %v437
        %v882 = vmul.f32 %v879, %v438
        %v886 = vrot.slane %v880, 4
        %v887 = vrot.slane %v881, 4
        %v888 = vsel %vm206, %v886, %v887
        %v889 = vrot.slane %v882, 4
        %v890 = vsel %vm206, %v887, %v889
        %891 = vrot.lane.b32.xlu0 %v888, 127
        %v892 = vpop.permute.xlu0 %891
        %893 = vrot.lane.b32.xlu0 %v890, 127
        %v894 = vpop.permute.xlu0 %893
        %v897 = vadd.f32 %v876, %v892
        %v898 = vadd.f32 %v877, %v894
        %s899 = sld [smem:[#allocation7 + $0x55]]
        %v900 = vstv %s899
        %v901 = vmul.f32 %v900, %v436
        %v902 = vmul.f32 %v900, %v437
        %v903 = vmul.f32 %v900, %v438
        %v907 = vrot.slane %v901, 5
        %v908 = vrot.slane %v902, 5
        %v909 = vsel %vm388, %v907, %v908
        %v910 = vrot.slane %v903, 5
        %v911 = vsel %vm388, %v908, %v910
        %912 = vrot.lane.b32.xlu0 %v909, 127
        %v913 = vpop.permute.xlu0 %912
        %914 = vrot.lane.b32.xlu0 %v911, 127
        %v915 = vpop.permute.xlu0 %914
        %v918 = vadd.f32 %v897, %v913
        %v919 = vadd.f32 %v898, %v915
        %s920 = sld [smem:[#allocation7 + $0x5c]]
        %v921 = vstv %s920
        %v922 = vmul.f32 %v921, %v436
        %v923 = vmul.f32 %v921, %v437
        %v924 = vmul.f32 %v921, %v438
        %v928 = vrot.slane %v922, 6
        %v929 = vrot.slane %v923, 6
        %v930 = vsel %vm543, %v928, %v929
        %v931 = vrot.slane %v924, 6
        %v932 = vsel %vm543, %v929, %v931
        %933 = vrot.lane.b32.xlu0 %v930, 127
        %v934 = vpop.permute.xlu0 %933
        %935 = vrot.lane.b32.xlu0 %v932, 127
        %v936 = vpop.permute.xlu0 %935
        %v939 = vadd.f32 %v918, %v934
        %v940 = vadd.f32 %v919, %v936
        %s941 = sld [smem:[#allocation7 + $0x2]]
        %v942 = vstv %s941
        %v943 = vmul.f32 %v942, %v433
        %v944 = vmul.f32 %v942, %v434
        %947 = vrot.lane.b32.xlu0 %v943, 126
        %v948 = vpop.permute.xlu0 %947
        %949 = vrot.lane.b32.xlu0 %v944, 126
        %v950 = vpop.permute.xlu0 %949
        %v953 = vadd.f32 %v939, %v948
        %v954 = vadd.f32 %v940, %v950
        %s955 = sld [smem:[#allocation7 + $0x9]]
        %v956 = vstv %s955
        %v957 = vmul.f32 %v956, %v433
        %v958 = vmul.f32 %v956, %v434
        %v959 = vmul.f32 %v956, %v435
        %v963 = vrot.slane %v957, 1
        %v964 = vrot.slane %v958, 1
        %v965 = vsel %vm455, %v963, %v964
        %v966 = vrot.slane %v959, 1
        %v967 = vsel %vm455, %v964, %v966
        %968 = vrot.lane.b32.xlu0 %v965, 126
        %v969 = vpop.permute.xlu0 %968
        %970 = vrot.lane.b32.xlu0 %v967, 126
        %v971 = vpop.permute.xlu0 %970
        %v974 = vadd.f32 %v953, %v969
        %v975 = vadd.f32 %v954, %v971
        %s976 = sld [smem:[#allocation7 + $0x10]]
        %v977 = vstv %s976
        %v978 = vmul.f32 %v977, %v433
        %v979 = vmul.f32 %v977, %v434
        %v980 = vmul.f32 %v977, %v435
        %v984 = vrot.slane %v978, 2
        %v985 = vrot.slane %v979, 2
        %v986 = vsel %vm473, %v984, %v985
        %v987 = vrot.slane %v980, 2
        %v988 = vsel %vm473, %v985, %v987
        %989 = vrot.lane.b32.xlu0 %v986, 126
        %v990 = vpop.permute.xlu0 %989
        %991 = vrot.lane.b32.xlu0 %v988, 126
        %v992 = vpop.permute.xlu0 %991
        %v995 = vadd.f32 %v974, %v990
        %v996 = vadd.f32 %v975, %v992
        %s997 = sld [smem:[#allocation7 + $0x17]]
        %v998 = vstv %s997
        %v999 = vmul.f32 %v998, %v433
        %v1000 = vmul.f32 %v998, %v434
        %v1001 = vmul.f32 %v998, %v435
        %v1005 = vrot.slane %v999, 3
        %v1006 = vrot.slane %v1000, 3
        %v1007 = vsel %vm491, %v1005, %v1006
        %v1008 = vrot.slane %v1001, 3
        %v1009 = vsel %vm491, %v1006, %v1008
        %1010 = vrot.lane.b32.xlu0 %v1007, 126
        %v1011 = vpop.permute.xlu0 %1010
        %1012 = vrot.lane.b32.xlu0 %v1009, 126
        %v1013 = vpop.permute.xlu0 %1012
        %v1016 = vadd.f32 %v995, %v1011
        %v1017 = vadd.f32 %v996, %v1013
        %s1018 = sld [smem:[#allocation7 + $0x1e]]
        %v1019 = vstv %s1018
        %v1020 = vmul.f32 %v1019, %v433
        %v1021 = vmul.f32 %v1019, %v434
        %v1022 = vmul.f32 %v1019, %v435
        %v1026 = vrot.slane %v1020, 4
        %v1027 = vrot.slane %v1021, 4
        %v1028 = vsel %vm206, %v1026, %v1027
        %v1029 = vrot.slane %v1022, 4
        %v1030 = vsel %vm206, %v1027, %v1029
        %1031 = vrot.lane.b32.xlu0 %v1028, 126
        %v1032 = vpop.permute.xlu0 %1031
        %1033 = vrot.lane.b32.xlu0 %v1030, 126
        %v1034 = vpop.permute.xlu0 %1033
        %v1037 = vadd.f32 %v1016, %v1032
        %v1038 = vadd.f32 %v1017, %v1034
        %s1039 = sld [smem:[#allocation7 + $0x25]]
        %v1040 = vstv %s1039
        %v1041 = vmul.f32 %v1040, %v433
        %v1042 = vmul.f32 %v1040, %v434
        %v1043 = vmul.f32 %v1040, %v435
        %v1047 = vrot.slane %v1041, 5
        %v1048 = vrot.slane %v1042, 5
        %v1049 = vsel %vm388, %v1047, %v1048
        %v1050 = vrot.slane %v1043, 5
        %v1051 = vsel %vm388, %v1048, %v1050
        %1052 = vrot.lane.b32.xlu0 %v1049, 126
        %v1053 = vpop.permute.xlu0 %1052
        %1054 = vrot.lane.b32.xlu0 %v1051, 126
        %v1055 = vpop.permute.xlu0 %1054
        %v1058 = vadd.f32 %v1037, %v1053
        %v1059 = vadd.f32 %v1038, %v1055
        %s1060 = sld [smem:[#allocation7 + $0x2c]]
        %v1061 = vstv %s1060
        %v1062 = vmul.f32 %v1061, %v433
        %v1063 = vmul.f32 %v1061, %v434
        %v1064 = vmul.f32 %v1061, %v435
        %v1068 = vrot.slane %v1062, 6
        %v1069 = vrot.slane %v1063, 6
        %v1070 = vsel %vm543, %v1068, %v1069
        %v1071 = vrot.slane %v1064, 6
        %v1072 = vsel %vm543, %v1069, %v1071
        %1073 = vrot.lane.b32.xlu0 %v1070, 126
        %v1074 = vpop.permute.xlu0 %1073
        %1075 = vrot.lane.b32.xlu0 %v1072, 126
        %v1076 = vpop.permute.xlu0 %1075
        %v1079 = vadd.f32 %v1058, %v1074
        %v1080 = vadd.f32 %v1059, %v1076
        %s1081 = sld [smem:[#allocation7 + $0x33]]
        %v1082 = vstv %s1081
        %v1083 = vmul.f32 %v1082, %v436
        %v1084 = vmul.f32 %v1082, %v437
        %1087 = vrot.lane.b32.xlu0 %v1083, 126
        %v1088 = vpop.permute.xlu0 %1087
        %1089 = vrot.lane.b32.xlu0 %v1084, 126
        %v1090 = vpop.permute.xlu0 %1089
        %v1093 = vadd.f32 %v1079, %v1088
        %v1094 = vadd.f32 %v1080, %v1090
        %s1095 = sld [smem:[#allocation7 + $0x3a]]
        %v1096 = vstv %s1095
        %v1097 = vmul.f32 %v1096, %v436
        %v1098 = vmul.f32 %v1096, %v437
        %v1099 = vmul.f32 %v1096, %v438
        %v1103 = vrot.slane %v1097, 1
        %v1104 = vrot.slane %v1098, 1
        %v1105 = vsel %vm455, %v1103, %v1104
        %v1106 = vrot.slane %v1099, 1
        %v1107 = vsel %vm455, %v1104, %v1106
        %1108 = vrot.lane.b32.xlu0 %v1105, 126
        %v1109 = vpop.permute.xlu0 %1108
        %1110 = vrot.lane.b32.xlu0 %v1107, 126
        %v1111 = vpop.permute.xlu0 %1110
        %v1114 = vadd.f32 %v1093, %v1109
        %v1115 = vadd.f32 %v1094, %v1111
        %s1116 = sld [smem:[#allocation7 + $0x41]]
        %v1117 = vstv %s1116
        %v1118 = vmul.f32 %v1117, %v436
        %v1119 = vmul.f32 %v1117, %v437
        %v1120 = vmul.f32 %v1117, %v438
        %v1124 = vrot.slane %v1118, 2
        %v1125 = vrot.slane %v1119, 2
        %v1126 = vsel %vm473, %v1124, %v1125
        %v1127 = vrot.slane %v1120, 2
        %v1128 = vsel %vm473, %v1125, %v1127
        %1129 = vrot.lane.b32.xlu0 %v1126, 126
        %v1130 = vpop.permute.xlu0 %1129
        %1131 = vrot.lane.b32.xlu0 %v1128, 126
        %v1132 = vpop.permute.xlu0 %1131
        %v1135 = vadd.f32 %v1114, %v1130
        %v1136 = vadd.f32 %v1115, %v1132
        %s1137 = sld [smem:[#allocation7 + $0x48]]
        %v1138 = vstv %s1137
        %v1139 = vmul.f32 %v1138, %v436
        %v1140 = vmul.f32 %v1138, %v437
        %v1141 = vmul.f32 %v1138, %v438
        %v1145 = vrot.slane %v1139, 3
        %v1146 = vrot.slane %v1140, 3
        %v1147 = vsel %vm491, %v1145, %v1146
        %v1148 = vrot.slane %v1141, 3
        %v1149 = vsel %vm491, %v1146, %v1148
        %1150 = vrot.lane.b32.xlu0 %v1147, 126
        %v1151 = vpop.permute.xlu0 %1150
        %1152 = vrot.lane.b32.xlu0 %v1149, 126
        %v1153 = vpop.permute.xlu0 %1152
        %v1156 = vadd.f32 %v1135, %v1151
        %v1157 = vadd.f32 %v1136, %v1153
        %s1158 = sld [smem:[#allocation7 + $0x4f]]
        %v1159 = vstv %s1158
        %v1160 = vmul.f32 %v1159, %v436
        %v1161 = vmul.f32 %v1159, %v437
        %v1162 = vmul.f32 %v1159, %v438
        %v1166 = vrot.slane %v1160, 4
        %v1167 = vrot.slane %v1161, 4
        %v1168 = vsel %vm206, %v1166, %v1167
        %v1169 = vrot.slane %v1162, 4
        %v1170 = vsel %vm206, %v1167, %v1169
        %1171 = vrot.lane.b32.xlu0 %v1168, 126
        %v1172 = vpop.permute.xlu0 %1171
        %1173 = vrot.lane.b32.xlu0 %v1170, 126
        %v1174 = vpop.permute.xlu0 %1173
        %v1177 = vadd.f32 %v1156, %v1172
        %v1178 = vadd.f32 %v1157, %v1174
        %s1179 = sld [smem:[#allocation7 + $0x56]]
        %v1180 = vstv %s1179
        %v1181 = vmul.f32 %v1180, %v436
        %v1182 = vmul.f32 %v1180, %v437
        %v1183 = vmul.f32 %v1180, %v438
        %v1187 = vrot.slane %v1181, 5
        %v1188 = vrot.slane %v1182, 5
        %v1189 = vsel %vm388, %v1187, %v1188
        %v1190 = vrot.slane %v1183, 5
        %v1191 = vsel %vm388, %v1188, %v1190
        %1192 = vrot.lane.b32.xlu0 %v1189, 126
        %v1193 = vpop.permute.xlu0 %1192
        %1194 = vrot.lane.b32.xlu0 %v1191, 126
        %v1195 = vpop.permute.xlu0 %1194
        %v1198 = vadd.f32 %v1177, %v1193
        %v1199 = vadd.f32 %v1178, %v1195
        %s1200 = sld [smem:[#allocation7 + $0x5d]]
        %v1201 = vstv %s1200
        %v1202 = vmul.f32 %v1201, %v436
        %v1203 = vmul.f32 %v1201, %v437
        %v1204 = vmul.f32 %v1201, %v438
        %v1208 = vrot.slane %v1202, 6
        %v1209 = vrot.slane %v1203, 6
        %v1210 = vsel %vm543, %v1208, %v1209
        %v1211 = vrot.slane %v1204, 6
        %v1212 = vsel %vm543, %v1209, %v1211
        %1213 = vrot.lane.b32.xlu0 %v1210, 126
        %v1214 = vpop.permute.xlu0 %1213
        %1215 = vrot.lane.b32.xlu0 %v1212, 126
        %v1216 = vpop.permute.xlu0 %1215
        %v1219 = vadd.f32 %v1198, %v1214
        %v1220 = vadd.f32 %v1199, %v1216
        %s1221 = sld [smem:[#allocation7 + $0x3]]
        %v1222 = vstv %s1221
        %v1223 = vmul.f32 %v1222, %v433
        %v1224 = vmul.f32 %v1222, %v434
        %1227 = vrot.lane.b32.xlu0 %v1223, 125
        %v1228 = vpop.permute.xlu0 %1227
        %1229 = vrot.lane.b32.xlu0 %v1224, 125
        %v1230 = vpop.permute.xlu0 %1229
        %v1233 = vadd.f32 %v1219, %v1228
        %v1234 = vadd.f32 %v1220, %v1230
        %s1235 = sld [smem:[#allocation7 + $0xa]]
        %v1236 = vstv %s1235
        %v1237 = vmul.f32 %v1236, %v433
        %v1238 = vmul.f32 %v1236, %v434
        %v1239 = vmul.f32 %v1236, %v435
        %v1243 = vrot.slane %v1237, 1
        %v1244 = vrot.slane %v1238, 1
        %v1245 = vsel %vm455, %v1243, %v1244
        %v1246 = vrot.slane %v1239, 1
        %v1247 = vsel %vm455, %v1244, %v1246
        %1248 = vrot.lane.b32.xlu0 %v1245, 125
        %v1249 = vpop.permute.xlu0 %1248
        %1250 = vrot.lane.b32.xlu0 %v1247, 125
        %v1251 = vpop.permute.xlu0 %1250
        %v1254 = vadd.f32 %v1233, %v1249
        %v1255 = vadd.f32 %v1234, %v1251
        %s1256 = sld [smem:[#allocation7 + $0x11]]
        %v1257 = vstv %s1256
        %v1258 = vmul.f32 %v1257, %v433
        %v1259 = vmul.f32 %v1257, %v434
        %v1260 = vmul.f32 %v1257, %v435
        %v1264 = vrot.slane %v1258, 2
        %v1265 = vrot.slane %v1259, 2
        %v1266 = vsel %vm473, %v1264, %v1265
        %v1267 = vrot.slane %v1260, 2
        %v1268 = vsel %vm473, %v1265, %v1267
        %1269 = vrot.lane.b32.xlu0 %v1266, 125
        %v1270 = vpop.permute.xlu0 %1269
        %1271 = vrot.lane.b32.xlu0 %v1268, 125
        %v1272 = vpop.permute.xlu0 %1271
        %v1275 = vadd.f32 %v1254, %v1270
        %v1276 = vadd.f32 %v1255, %v1272
        %s1277 = sld [smem:[#allocation7 + $0x18]]
        %v1278 = vstv %s1277
        %v1279 = vmul.f32 %v1278, %v433
        %v1280 = vmul.f32 %v1278, %v434
        %v1281 = vmul.f32 %v1278, %v435
        %v1285 = vrot.slane %v1279, 3
        %v1286 = vrot.slane %v1280, 3
        %v1287 = vsel %vm491, %v1285, %v1286
        %v1288 = vrot.slane %v1281, 3
        %v1289 = vsel %vm491, %v1286, %v1288
        %1290 = vrot.lane.b32.xlu0 %v1287, 125
        %v1291 = vpop.permute.xlu0 %1290
        %1292 = vrot.lane.b32.xlu0 %v1289, 125
        %v1293 = vpop.permute.xlu0 %1292
        %v1296 = vadd.f32 %v1275, %v1291
        %v1297 = vadd.f32 %v1276, %v1293
        %s1298 = sld [smem:[#allocation7 + $0x1f]]
        %v1299 = vstv %s1298
        %v1300 = vmul.f32 %v1299, %v433
        %v1301 = vmul.f32 %v1299, %v434
        %v1302 = vmul.f32 %v1299, %v435
        %v1306 = vrot.slane %v1300, 4
        %v1307 = vrot.slane %v1301, 4
        %v1308 = vsel %vm206, %v1306, %v1307
        %v1309 = vrot.slane %v1302, 4
        %v1310 = vsel %vm206, %v1307, %v1309
        %1311 = vrot.lane.b32.xlu0 %v1308, 125
        %v1312 = vpop.permute.xlu0 %1311
        %1313 = vrot.lane.b32.xlu0 %v1310, 125
        %v1314 = vpop.permute.xlu0 %1313
        %v1317 = vadd.f32 %v1296, %v1312
        %v1318 = vadd.f32 %v1297, %v1314
        %s1319 = sld [smem:[#allocation7 + $0x26]]
        %v1320 = vstv %s1319
        %v1321 = vmul.f32 %v1320, %v433
        %v1322 = vmul.f32 %v1320, %v434
        %v1323 = vmul.f32 %v1320, %v435
        %v1327 = vrot.slane %v1321, 5
        %v1328 = vrot.slane %v1322, 5
        %v1329 = vsel %vm388, %v1327, %v1328
        %v1330 = vrot.slane %v1323, 5
        %v1331 = vsel %vm388, %v1328, %v1330
        %1332 = vrot.lane.b32.xlu0 %v1329, 125
        %v1333 = vpop.permute.xlu0 %1332
        %1334 = vrot.lane.b32.xlu0 %v1331, 125
        %v1335 = vpop.permute.xlu0 %1334
        %v1338 = vadd.f32 %v1317, %v1333
        %v1339 = vadd.f32 %v1318, %v1335
        %s1340 = sld [smem:[#allocation7 + $0x2d]]
        %v1341 = vstv %s1340
        %v1342 = vmul.f32 %v1341, %v433
        %v1343 = vmul.f32 %v1341, %v434
        %v1344 = vmul.f32 %v1341, %v435
        %v1348 = vrot.slane %v1342, 6
        %v1349 = vrot.slane %v1343, 6
        %v1350 = vsel %vm543, %v1348, %v1349
        %v1351 = vrot.slane %v1344, 6
        %v1352 = vsel %vm543, %v1349, %v1351
        %1353 = vrot.lane.b32.xlu0 %v1350, 125
        %v1354 = vpop.permute.xlu0 %1353
        %1355 = vrot.lane.b32.xlu0 %v1352, 125
        %v1356 = vpop.permute.xlu0 %1355
        %v1359 = vadd.f32 %v1338, %v1354
        %v1360 = vadd.f32 %v1339, %v1356
        %s1361 = sld [smem:[#allocation7 + $0x34]]
        %v1362 = vstv %s1361
        %v1363 = vmul.f32 %v1362, %v436
        %v1364 = vmul.f32 %v1362, %v437
        %1367 = vrot.lane.b32.xlu0 %v1363, 125
        %v1368 = vpop.permute.xlu0 %1367
        %1369 = vrot.lane.b32.xlu0 %v1364, 125
        %v1370 = vpop.permute.xlu0 %1369
        %v1373 = vadd.f32 %v1359, %v1368
        %v1374 = vadd.f32 %v1360, %v1370
        %s1375 = sld [smem:[#allocation7 + $0x3b]]
        %v1376 = vstv %s1375
        %v1377 = vmul.f32 %v1376, %v436
        %v1378 = vmul.f32 %v1376, %v437
        %v1379 = vmul.f32 %v1376, %v438
        %v1383 = vrot.slane %v1377, 1
        %v1384 = vrot.slane %v1378, 1
        %v1385 = vsel %vm455, %v1383, %v1384
        %v1386 = vrot.slane %v1379, 1
        %v1387 = vsel %vm455, %v1384, %v1386
        %1388 = vrot.lane.b32.xlu0 %v1385, 125
        %v1389 = vpop.permute.xlu0 %1388
        %1390 = vrot.lane.b32.xlu0 %v1387, 125
        %v1391 = vpop.permute.xlu0 %1390
        %v1394 = vadd.f32 %v1373, %v1389
        %v1395 = vadd.f32 %v1374, %v1391
        %s1396 = sld [smem:[#allocation7 + $0x42]]
        %v1397 = vstv %s1396
        %v1398 = vmul.f32 %v1397, %v436
        %v1399 = vmul.f32 %v1397, %v437
        %v1400 = vmul.f32 %v1397, %v438
        %v1404 = vrot.slane %v1398, 2
        %v1405 = vrot.slane %v1399, 2
        %v1406 = vsel %vm473, %v1404, %v1405
        %v1407 = vrot.slane %v1400, 2
        %v1408 = vsel %vm473, %v1405, %v1407
        %1409 = vrot.lane.b32.xlu0 %v1406, 125
        %v1410 = vpop.permute.xlu0 %1409
        %1411 = vrot.lane.b32.xlu0 %v1408, 125
        %v1412 = vpop.permute.xlu0 %1411
        %v1415 = vadd.f32 %v1394, %v1410
        %v1416 = vadd.f32 %v1395, %v1412
        %s1417 = sld [smem:[#allocation7 + $0x49]]
        %v1418 = vstv %s1417
        %v1419 = vmul.f32 %v1418, %v436
        %v1420 = vmul.f32 %v1418, %v437
        %v1421 = vmul.f32 %v1418, %v438
        %v1425 = vrot.slane %v1419, 3
        %v1426 = vrot.slane %v1420, 3
        %v1427 = vsel %vm491, %v1425, %v1426
        %v1428 = vrot.slane %v1421, 3
        %v1429 = vsel %vm491, %v1426, %v1428
        %1430 = vrot.lane.b32.xlu0 %v1427, 125
        %v1431 = vpop.permute.xlu0 %1430
        %1432 = vrot.lane.b32.xlu0 %v1429, 125
        %v1433 = vpop.permute.xlu0 %1432
        %v1436 = vadd.f32 %v1415, %v1431
        %v1437 = vadd.f32 %v1416, %v1433
        %s1438 = sld [smem:[#allocation7 + $0x50]]
        %v1439 = vstv %s1438
        %v1440 = vmul.f32 %v1439, %v436
        %v1441 = vmul.f32 %v1439, %v437
        %v1442 = vmul.f32 %v1439, %v438
        %v1446 = vrot.slane %v1440, 4
        %v1447 = vrot.slane %v1441, 4
        %v1448 = vsel %vm206, %v1446, %v1447
        %v1449 = vrot.slane %v1442, 4
        %v1450 = vsel %vm206, %v1447, %v1449
        %1451 = vrot.lane.b32.xlu0 %v1448, 125
        %v1452 = vpop.permute.xlu0 %1451
        %1453 = vrot.lane.b32.xlu0 %v1450, 125
        %v1454 = vpop.permute.xlu0 %1453
        %v1457 = vadd.f32 %v1436, %v1452
        %v1458 = vadd.f32 %v1437, %v1454
        %s1459 = sld [smem:[#allocation7 + $0x57]]
        %v1460 = vstv %s1459
        %v1461 = vmul.f32 %v1460, %v436
        %v1462 = vmul.f32 %v1460, %v437
        %v1463 = vmul.f32 %v1460, %v438
        %v1467 = vrot.slane %v1461, 5
        %v1468 = vrot.slane %v1462, 5
        %v1469 = vsel %vm388, %v1467, %v1468
        %v1470 = vrot.slane %v1463, 5
        %v1471 = vsel %vm388, %v1468, %v1470
        %1472 = vrot.lane.b32.xlu0 %v1469, 125
        %v1473 = vpop.permute.xlu0 %1472
        %1474 = vrot.lane.b32.xlu0 %v1471, 125
        %v1475 = vpop.permute.xlu0 %1474
        %v1478 = vadd.f32 %v1457, %v1473
        %v1479 = vadd.f32 %v1458, %v1475
        %s1480 = sld [smem:[#allocation7 + $0x5e]]
        %v1481 = vstv %s1480
        %v1482 = vmul.f32 %v1481, %v436
        %v1483 = vmul.f32 %v1481, %v437
        %v1484 = vmul.f32 %v1481, %v438
        %v1488 = vrot.slane %v1482, 6
        %v1489 = vrot.slane %v1483, 6
        %v1490 = vsel %vm543, %v1488, %v1489
        %v1491 = vrot.slane %v1484, 6
        %v1492 = vsel %vm543, %v1489, %v1491
        %1493 = vrot.lane.b32.xlu0 %v1490, 125
        %v1494 = vpop.permute.xlu0 %1493
        %1495 = vrot.lane.b32.xlu0 %v1492, 125
        %v1496 = vpop.permute.xlu0 %1495
        %v1499 = vadd.f32 %v1478, %v1494
        %v1500 = vadd.f32 %v1479, %v1496
        %s1501 = sld [smem:[#allocation7 + $0x4]]
        %v1502 = vstv %s1501
        %v1503 = vmul.f32 %v1502, %v433
        %v1504 = vmul.f32 %v1502, %v434
        %1507 = vrot.lane.b32.xlu0 %v1503, 124
        %v1508 = vpop.permute.xlu0 %1507
        %1509 = vrot.lane.b32.xlu0 %v1504, 124
        %v1510 = vpop.permute.xlu0 %1509
        %v1513 = vadd.f32 %v1499, %v1508
        %v1514 = vadd.f32 %v1500, %v1510
        %s1515 = sld [smem:[#allocation7 + $0xb]]
        %v1516 = vstv %s1515
        %v1517 = vmul.f32 %v1516, %v433
        %v1518 = vmul.f32 %v1516, %v434
        %v1519 = vmul.f32 %v1516, %v435
        %v1523 = vrot.slane %v1517, 1
        %v1524 = vrot.slane %v1518, 1
        %v1525 = vsel %vm455, %v1523, %v1524
        %v1526 = vrot.slane %v1519, 1
        %v1527 = vsel %vm455, %v1524, %v1526
        %1528 = vrot.lane.b32.xlu0 %v1525, 124
        %v1529 = vpop.permute.xlu0 %1528
        %1530 = vrot.lane.b32.xlu0 %v1527, 124
        %v1531 = vpop.permute.xlu0 %1530
        %v1534 = vadd.f32 %v1513, %v1529
        %v1535 = vadd.f32 %v1514, %v1531
        %s1536 = sld [smem:[#allocation7 + $0x12]]
        %v1537 = vstv %s1536
        %v1538 = vmul.f32 %v1537, %v433
        %v1539 = vmul.f32 %v1537, %v434
        %v1540 = vmul.f32 %v1537, %v435
        %v1544 = vrot.slane %v1538, 2
        %v1545 = vrot.slane %v1539, 2
        %v1546 = vsel %vm473, %v1544, %v1545
        %v1547 = vrot.slane %v1540, 2
        %v1548 = vsel %vm473, %v1545, %v1547
        %1549 = vrot.lane.b32.xlu0 %v1546, 124
        %v1550 = vpop.permute.xlu0 %1549
        %1551 = vrot.lane.b32.xlu0 %v1548, 124
        %v1552 = vpop.permute.xlu0 %1551
        %v1555 = vadd.f32 %v1534, %v1550
        %v1556 = vadd.f32 %v1535, %v1552
        %s1557 = sld [smem:[#allocation7 + $0x19]]
        %v1558 = vstv %s1557
        %v1559 = vmul.f32 %v1558, %v433
        %v1560 = vmul.f32 %v1558, %v434
        %v1561 = vmul.f32 %v1558, %v435
        %v1565 = vrot.slane %v1559, 3
        %v1566 = vrot.slane %v1560, 3
        %v1567 = vsel %vm491, %v1565, %v1566
        %v1568 = vrot.slane %v1561, 3
        %v1569 = vsel %vm491, %v1566, %v1568
        %1570 = vrot.lane.b32.xlu0 %v1567, 124
        %v1571 = vpop.permute.xlu0 %1570
        %1572 = vrot.lane.b32.xlu0 %v1569, 124
        %v1573 = vpop.permute.xlu0 %1572
        %v1576 = vadd.f32 %v1555, %v1571
        %v1577 = vadd.f32 %v1556, %v1573
        %s1578 = sld [smem:[#allocation7 + $0x20]]
        %v1579 = vstv %s1578
        %v1580 = vmul.f32 %v1579, %v433
        %v1581 = vmul.f32 %v1579, %v434
        %v1582 = vmul.f32 %v1579, %v435
        %v1586 = vrot.slane %v1580, 4
        %v1587 = vrot.slane %v1581, 4
        %v1588 = vsel %vm206, %v1586, %v1587
        %v1589 = vrot.slane %v1582, 4
        %v1590 = vsel %vm206, %v1587, %v1589
        %1591 = vrot.lane.b32.xlu0 %v1588, 124
        %v1592 = vpop.permute.xlu0 %1591
        %1593 = vrot.lane.b32.xlu0 %v1590, 124
        %v1594 = vpop.permute.xlu0 %1593
        %v1597 = vadd.f32 %v1576, %v1592
        %v1598 = vadd.f32 %v1577, %v1594
        %s1599 = sld [smem:[#allocation7 + $0x27]]
        %v1600 = vstv %s1599
        %v1601 = vmul.f32 %v1600, %v433
        %v1602 = vmul.f32 %v1600, %v434
        %v1603 = vmul.f32 %v1600, %v435
        %v1607 = vrot.slane %v1601, 5
        %v1608 = vrot.slane %v1602, 5
        %v1609 = vsel %vm388, %v1607, %v1608
        %v1610 = vrot.slane %v1603, 5
        %v1611 = vsel %vm388, %v1608, %v1610
        %1612 = vrot.lane.b32.xlu0 %v1609, 124
        %v1613 = vpop.permute.xlu0 %1612
        %1614 = vrot.lane.b32.xlu0 %v1611, 124
        %v1615 = vpop.permute.xlu0 %1614
        %v1618 = vadd.f32 %v1597, %v1613
        %v1619 = vadd.f32 %v1598, %v1615
        %s1620 = sld [smem:[#allocation7 + $0x2e]]
        %v1621 = vstv %s1620
        %v1622 = vmul.f32 %v1621, %v433
        %v1623 = vmul.f32 %v1621, %v434
        %v1624 = vmul.f32 %v1621, %v435
        %v1628 = vrot.slane %v1622, 6
        %v1629 = vrot.slane %v1623, 6
        %v1630 = vsel %vm543, %v1628, %v1629
        %v1631 = vrot.slane %v1624, 6
        %v1632 = vsel %vm543, %v1629, %v1631
        %1633 = vrot.lane.b32.xlu0 %v1630, 124
        %v1634 = vpop.permute.xlu0 %1633
        %1635 = vrot.lane.b32.xlu0 %v1632, 124
        %v1636 = vpop.permute.xlu0 %1635
        %v1639 = vadd.f32 %v1618, %v1634
        %v1640 = vadd.f32 %v1619, %v1636
        %s1641 = sld [smem:[#allocation7 + $0x35]]
        %v1642 = vstv %s1641
        %v1643 = vmul.f32 %v1642, %v436
        %v1644 = vmul.f32 %v1642, %v437
        %1647 = vrot.lane.b32.xlu0 %v1643, 124
        %v1648 = vpop.permute.xlu0 %1647
        %1649 = vrot.lane.b32.xlu0 %v1644, 124
        %v1650 = vpop.permute.xlu0 %1649
        %v1653 = vadd.f32 %v1639, %v1648
        %v1654 = vadd.f32 %v1640, %v1650
        %s1655 = sld [smem:[#allocation7 + $0x3c]]
        %v1656 = vstv %s1655
        %v1657 = vmul.f32 %v1656, %v436
        %v1658 = vmul.f32 %v1656, %v437
        %v1659 = vmul.f32 %v1656, %v438
        %v1663 = vrot.slane %v1657, 1
        %v1664 = vrot.slane %v1658, 1
        %v1665 = vsel %vm455, %v1663, %v1664
        %v1666 = vrot.slane %v1659, 1
        %v1667 = vsel %vm455, %v1664, %v1666
        %1668 = vrot.lane.b32.xlu0 %v1665, 124
        %v1669 = vpop.permute.xlu0 %1668
        %1670 = vrot.lane.b32.xlu0 %v1667, 124
        %v1671 = vpop.permute.xlu0 %1670
        %v1674 = vadd.f32 %v1653, %v1669
        %v1675 = vadd.f32 %v1654, %v1671
        %s1676 = sld [smem:[#allocation7 + $0x43]]
        %v1677 = vstv %s1676
        %v1678 = vmul.f32 %v1677, %v436
        %v1679 = vmul.f32 %v1677, %v437
        %v1680 = vmul.f32 %v1677, %v438
        %v1684 = vrot.slane %v1678, 2
        %v1685 = vrot.slane %v1679, 2
        %v1686 = vsel %vm473, %v1684, %v1685
        %v1687 = vrot.slane %v1680, 2
        %v1688 = vsel %vm473, %v1685, %v1687
        %1689 = vrot.lane.b32.xlu0 %v1686, 124
        %v1690 = vpop.permute.xlu0 %1689
        %1691 = vrot.lane.b32.xlu0 %v1688, 124
        %v1692 = vpop.permute.xlu0 %1691
        %v1695 = vadd.f32 %v1674, %v1690
        %v1696 = vadd.f32 %v1675, %v1692
        %s1697 = sld [smem:[#allocation7 + $0x4a]]
        %v1698 = vstv %s1697
        %v1699 = vmul.f32 %v1698, %v436
        %v1700 = vmul.f32 %v1698, %v437
        %v1701 = vmul.f32 %v1698, %v438
        %v1705 = vrot.slane %v1699, 3
        %v1706 = vrot.slane %v1700, 3
        %v1707 = vsel %vm491, %v1705, %v1706
        %v1708 = vrot.slane %v1701, 3
        %v1709 = vsel %vm491, %v1706, %v1708
        %1710 = vrot.lane.b32.xlu0 %v1707, 124
        %v1711 = vpop.permute.xlu0 %1710
        %1712 = vrot.lane.b32.xlu0 %v1709, 124
        %v1713 = vpop.permute.xlu0 %1712
        %v1716 = vadd.f32 %v1695, %v1711
        %v1717 = vadd.f32 %v1696, %v1713
        %s1718 = sld [smem:[#allocation7 + $0x51]]
        %v1719 = vstv %s1718
        %v1720 = vmul.f32 %v1719, %v436
        %v1721 = vmul.f32 %v1719, %v437
        %v1722 = vmul.f32 %v1719, %v438
        %v1726 = vrot.slane %v1720, 4
        %v1727 = vrot.slane %v1721, 4
        %v1728 = vsel %vm206, %v1726, %v1727
        %v1729 = vrot.slane %v1722, 4
        %v1730 = vsel %vm206, %v1727, %v1729
        %1731 = vrot.lane.b32.xlu0 %v1728, 124
        %v1732 = vpop.permute.xlu0 %1731
        %1733 = vrot.lane.b32.xlu0 %v1730, 124
        %v1734 = vpop.permute.xlu0 %1733
        %v1737 = vadd.f32 %v1716, %v1732
        %v1738 = vadd.f32 %v1717, %v1734
        %s1739 = sld [smem:[#allocation7 + $0x58]]
        %v1740 = vstv %s1739
        %v1741 = vmul.f32 %v1740, %v436
        %v1742 = vmul.f32 %v1740, %v437
        %v1743 = vmul.f32 %v1740, %v438
        %v1747 = vrot.slane %v1741, 5
        %v1748 = vrot.slane %v1742, 5
        %v1749 = vsel %vm388, %v1747, %v1748
        %v1750 = vrot.slane %v1743, 5
        %v1751 = vsel %vm388, %v1748, %v1750
        %1752 = vrot.lane.b32.xlu0 %v1749, 124
        %v1753 = vpop.permute.xlu0 %1752
        %1754 = vrot.lane.b32.xlu0 %v1751, 124
        %v1755 = vpop.permute.xlu0 %1754
        %v1758 = vadd.f32 %v1737, %v1753
        %v1759 = vadd.f32 %v1738, %v1755
        %s1760 = sld [smem:[#allocation7 + $0x5f]]
        %v1761 = vstv %s1760
        %v1762 = vmul.f32 %v1761, %v436
        %v1763 = vmul.f32 %v1761, %v437
        %v1764 = vmul.f32 %v1761, %v438
        %v1768 = vrot.slane %v1762, 6
        %v1769 = vrot.slane %v1763, 6
        %v1770 = vsel %vm543, %v1768, %v1769
        %v1771 = vrot.slane %v1764, 6
        %v1772 = vsel %vm543, %v1769, %v1771
        %1773 = vrot.lane.b32.xlu0 %v1770, 124
        %v1774 = vpop.permute.xlu0 %1773
        %1775 = vrot.lane.b32.xlu0 %v1772, 124
        %v1776 = vpop.permute.xlu0 %1775
        %v1779 = vadd.f32 %v1758, %v1774
        %v1780 = vadd.f32 %v1759, %v1776
        %s1781 = sld [smem:[#allocation7 + $0x5]]
        %v1782 = vstv %s1781
        %v1783 = vmul.f32 %v1782, %v433
        %v1784 = vmul.f32 %v1782, %v434
        %1787 = vrot.lane.b32.xlu0 %v1783, 123
        %v1788 = vpop.permute.xlu0 %1787
        %1789 = vrot.lane.b32.xlu0 %v1784, 123
        %v1790 = vpop.permute.xlu0 %1789
        %v1793 = vadd.f32 %v1779, %v1788
        %v1794 = vadd.f32 %v1780, %v1790
        %s1795 = sld [smem:[#allocation7 + $0xc]]
        %v1796 = vstv %s1795
        %v1797 = vmul.f32 %v1796, %v433
        %v1798 = vmul.f32 %v1796, %v434
        %v1799 = vmul.f32 %v1796, %v435
        %v1803 = vrot.slane %v1797, 1
        %v1804 = vrot.slane %v1798, 1
        %v1805 = vsel %vm455, %v1803, %v1804
        %v1806 = vrot.slane %v1799, 1
        %v1807 = vsel %vm455, %v1804, %v1806
        %1808 = vrot.lane.b32.xlu0 %v1805, 123
        %v1809 = vpop.permute.xlu0 %1808
        %1810 = vrot.lane.b32.xlu0 %v1807, 123
        %v1811 = vpop.permute.xlu0 %1810
        %v1814 = vadd.f32 %v1793, %v1809
        %v1815 = vadd.f32 %v1794, %v1811
        %s1816 = sld [smem:[#allocation7 + $0x13]]
        %v1817 = vstv %s1816
        %v1818 = vmul.f32 %v1817, %v433
        %v1819 = vmul.f32 %v1817, %v434
        %v1820 = vmul.f32 %v1817, %v435
        %v1824 = vrot.slane %v1818, 2
        %v1825 = vrot.slane %v1819, 2
        %v1826 = vsel %vm473, %v1824, %v1825
        %v1827 = vrot.slane %v1820, 2
        %v1828 = vsel %vm473, %v1825, %v1827
        %1829 = vrot.lane.b32.xlu0 %v1826, 123
        %v1830 = vpop.permute.xlu0 %1829
        %1831 = vrot.lane.b32.xlu0 %v1828, 123
        %v1832 = vpop.permute.xlu0 %1831
        %v1835 = vadd.f32 %v1814, %v1830
        %v1836 = vadd.f32 %v1815, %v1832
        %s1837 = sld [smem:[#allocation7 + $0x1a]]
        %v1838 = vstv %s1837
        %v1839 = vmul.f32 %v1838, %v433
        %v1840 = vmul.f32 %v1838, %v434
        %v1841 = vmul.f32 %v1838, %v435
        %v1845 = vrot.slane %v1839, 3
        %v1846 = vrot.slane %v1840, 3
        %v1847 = vsel %vm491, %v1845, %v1846
        %v1848 = vrot.slane %v1841, 3
        %v1849 = vsel %vm491, %v1846, %v1848
        %1850 = vrot.lane.b32.xlu0 %v1847, 123
        %v1851 = vpop.permute.xlu0 %1850
        %1852 = vrot.lane.b32.xlu0 %v1849, 123
        %v1853 = vpop.permute.xlu0 %1852
        %v1856 = vadd.f32 %v1835, %v1851
        %v1857 = vadd.f32 %v1836, %v1853
        %s1858 = sld [smem:[#allocation7 + $0x21]]
        %v1859 = vstv %s1858
        %v1860 = vmul.f32 %v1859, %v433
        %v1861 = vmul.f32 %v1859, %v434
        %v1862 = vmul.f32 %v1859, %v435
        %v1866 = vrot.slane %v1860, 4
        %v1867 = vrot.slane %v1861, 4
        %v1868 = vsel %vm206, %v1866, %v1867
        %v1869 = vrot.slane %v1862, 4
        %v1870 = vsel %vm206, %v1867, %v1869
        %1871 = vrot.lane.b32.xlu0 %v1868, 123
        %v1872 = vpop.permute.xlu0 %1871
        %1873 = vrot.lane.b32.xlu0 %v1870, 123
        %v1874 = vpop.permute.xlu0 %1873
        %v1877 = vadd.f32 %v1856, %v1872
        %v1878 = vadd.f32 %v1857, %v1874
        %s1879 = sld [smem:[#allocation7 + $0x28]]
        %v1880 = vstv %s1879
        %v1881 = vmul.f32 %v1880, %v433
        %v1882 = vmul.f32 %v1880, %v434
        %v1883 = vmul.f32 %v1880, %v435
        %v1887 = vrot.slane %v1881, 5
        %v1888 = vrot.slane %v1882, 5
        %v1889 = vsel %vm388, %v1887, %v1888
        %v1890 = vrot.slane %v1883, 5
        %v1891 = vsel %vm388, %v1888, %v1890
        %1892 = vrot.lane.b32.xlu0 %v1889, 123
        %v1893 = vpop.permute.xlu0 %1892
        %1894 = vrot.lane.b32.xlu0 %v1891, 123
        %v1895 = vpop.permute.xlu0 %1894
        %v1898 = vadd.f32 %v1877, %v1893
        %v1899 = vadd.f32 %v1878, %v1895
        %s1900 = sld [smem:[#allocation7 + $0x2f]]
        %v1901 = vstv %s1900
        %v1902 = vmul.f32 %v1901, %v433
        %v1903 = vmul.f32 %v1901, %v434
        %v1904 = vmul.f32 %v1901, %v435
        %v1908 = vrot.slane %v1902, 6
        %v1909 = vrot.slane %v1903, 6
        %v1910 = vsel %vm543, %v1908, %v1909
        %v1911 = vrot.slane %v1904, 6
        %v1912 = vsel %vm543, %v1909, %v1911
        %1913 = vrot.lane.b32.xlu0 %v1910, 123
        %v1914 = vpop.permute.xlu0 %1913
        %1915 = vrot.lane.b32.xlu0 %v1912, 123
        %v1916 = vpop.permute.xlu0 %1915
        %v1919 = vadd.f32 %v1898, %v1914
        %v1920 = vadd.f32 %v1899, %v1916
        %s1921 = sld [smem:[#allocation7 + $0x36]]
        %v1922 = vstv %s1921
        %v1923 = vmul.f32 %v1922, %v436
        %v1924 = vmul.f32 %v1922, %v437
        %1927 = vrot.lane.b32.xlu0 %v1923, 123
        %v1928 = vpop.permute.xlu0 %1927
        %1929 = vrot.lane.b32.xlu0 %v1924, 123
        %v1930 = vpop.permute.xlu0 %1929
        %v1933 = vadd.f32 %v1919, %v1928
        %v1934 = vadd.f32 %v1920, %v1930
        %s1935 = sld [smem:[#allocation7 + $0x3d]]
        %v1936 = vstv %s1935
        %v1937 = vmul.f32 %v1936, %v436
        %v1938 = vmul.f32 %v1936, %v437
        %v1939 = vmul.f32 %v1936, %v438
        %v1943 = vrot.slane %v1937, 1
        %v1944 = vrot.slane %v1938, 1
        %v1945 = vsel %vm455, %v1943, %v1944
        %v1946 = vrot.slane %v1939, 1
        %v1947 = vsel %vm455, %v1944, %v1946
        %1948 = vrot.lane.b32.xlu0 %v1945, 123
        %v1949 = vpop.permute.xlu0 %1948
        %1950 = vrot.lane.b32.xlu0 %v1947, 123
        %v1951 = vpop.permute.xlu0 %1950
        %v1954 = vadd.f32 %v1933, %v1949
        %v1955 = vadd.f32 %v1934, %v1951
        %s1956 = sld [smem:[#allocation7 + $0x44]]
        %v1957 = vstv %s1956
        %v1958 = vmul.f32 %v1957, %v436
        %v1959 = vmul.f32 %v1957, %v437
        %v1960 = vmul.f32 %v1957, %v438
        %v1964 = vrot.slane %v1958, 2
        %v1965 = vrot.slane %v1959, 2
        %v1966 = vsel %vm473, %v1964, %v1965
        %v1967 = vrot.slane %v1960, 2
        %v1968 = vsel %vm473, %v1965, %v1967
        %1969 = vrot.lane.b32.xlu0 %v1966, 123
        %v1970 = vpop.permute.xlu0 %1969
        %1971 = vrot.lane.b32.xlu0 %v1968, 123
        %v1972 = vpop.permute.xlu0 %1971
        %v1975 = vadd.f32 %v1954, %v1970
        %v1976 = vadd.f32 %v1955, %v1972
        %s1977 = sld [smem:[#allocation7 + $0x4b]]
        %v1978 = vstv %s1977
        %v1979 = vmul.f32 %v1978, %v436
        %v1980 = vmul.f32 %v1978, %v437
        %v1981 = vmul.f32 %v1978, %v438
        %v1985 = vrot.slane %v1979, 3
        %v1986 = vrot.slane %v1980, 3
        %v1987 = vsel %vm491, %v1985, %v1986
        %v1988 = vrot.slane %v1981, 3
        %v1989 = vsel %vm491, %v1986, %v1988
        %1990 = vrot.lane.b32.xlu0 %v1987, 123
        %v1991 = vpop.permute.xlu0 %1990
        %1992 = vrot.lane.b32.xlu0 %v1989, 123
        %v1993 = vpop.permute.xlu0 %1992
        %v1996 = vadd.f32 %v1975, %v1991
        %v1997 = vadd.f32 %v1976, %v1993
        %s1998 = sld [smem:[#allocation7 + $0x52]]
        %v1999 = vstv %s1998
        %v2000 = vmul.f32 %v1999, %v436
        %v2001 = vmul.f32 %v1999, %v437
        %v2002 = vmul.f32 %v1999, %v438
        %v2006 = vrot.slane %v2000, 4
        %v2007 = vrot.slane %v2001, 4
        %v2008 = vsel %vm206, %v2006, %v2007
        %v2009 = vrot.slane %v2002, 4
        %v2010 = vsel %vm206, %v2007, %v2009
        %2011 = vrot.lane.b32.xlu0 %v2008, 123
        %v2012 = vpop.permute.xlu0 %2011
        %2013 = vrot.lane.b32.xlu0 %v2010, 123
        %v2014 = vpop.permute.xlu0 %2013
        %v2017 = vadd.f32 %v1996, %v2012
        %v2018 = vadd.f32 %v1997, %v2014
        %s2019 = sld [smem:[#allocation7 + $0x59]]
        %v2020 = vstv %s2019
        %v2021 = vmul.f32 %v2020, %v436
        %v2022 = vmul.f32 %v2020, %v437
        %v2023 = vmul.f32 %v2020, %v438
        %v2027 = vrot.slane %v2021, 5
        %v2028 = vrot.slane %v2022, 5
        %v2029 = vsel %vm388, %v2027, %v2028
        %v2030 = vrot.slane %v2023, 5
        %v2031 = vsel %vm388, %v2028, %v2030
        %2032 = vrot.lane.b32.xlu0 %v2029, 123
        %v2033 = vpop.permute.xlu0 %2032
        %2034 = vrot.lane.b32.xlu0 %v2031, 123
        %v2035 = vpop.permute.xlu0 %2034
        %v2038 = vadd.f32 %v2017, %v2033
        %v2039 = vadd.f32 %v2018, %v2035
        %s2040 = sld [smem:[#allocation7 + $0x60]]
        %v2041 = vstv %s2040
        %v2042 = vmul.f32 %v2041, %v436
        %v2043 = vmul.f32 %v2041, %v437
        %v2044 = vmul.f32 %v2041, %v438
        %v2048 = vrot.slane %v2042, 6
        %v2049 = vrot.slane %v2043, 6
        %v2050 = vsel %vm543, %v2048, %v2049
        %v2051 = vrot.slane %v2044, 6
        %v2052 = vsel %vm543, %v2049, %v2051
        %2053 = vrot.lane.b32.xlu0 %v2050, 123
        %v2054 = vpop.permute.xlu0 %2053
        %2055 = vrot.lane.b32.xlu0 %v2052, 123
        %v2056 = vpop.permute.xlu0 %2055
        %v2059 = vadd.f32 %v2038, %v2054
        %v2060 = vadd.f32 %v2039, %v2056
        %s2061 = sld [smem:[#allocation7 + $0x6]]
        %v2062 = vstv %s2061
        %v2063 = vmul.f32 %v2062, %v433
        %v2064 = vmul.f32 %v2062, %v434
        %2067 = vrot.lane.b32.xlu0 %v2063, 122
        %v2068 = vpop.permute.xlu0 %2067
        %2069 = vrot.lane.b32.xlu0 %v2064, 122
        %v2070 = vpop.permute.xlu0 %2069
        %v2073 = vadd.f32 %v2059, %v2068
        %v2074 = vadd.f32 %v2060, %v2070
        %s2075 = sld [smem:[#allocation7 + $0xd]]
        %v2076 = vstv %s2075
        %v2077 = vmul.f32 %v2076, %v433
        %v2078 = vmul.f32 %v2076, %v434
        %v2079 = vmul.f32 %v2076, %v435
        %v2083 = vrot.slane %v2077, 1
        %v2084 = vrot.slane %v2078, 1
        %v2085 = vsel %vm455, %v2083, %v2084
        %v2086 = vrot.slane %v2079, 1
        %v2087 = vsel %vm455, %v2084, %v2086
        %2088 = vrot.lane.b32.xlu0 %v2085, 122
        %v2089 = vpop.permute.xlu0 %2088
        %2090 = vrot.lane.b32.xlu0 %v2087, 122
        %v2091 = vpop.permute.xlu0 %2090
        %v2094 = vadd.f32 %v2073, %v2089
        %v2095 = vadd.f32 %v2074, %v2091
        %s2096 = sld [smem:[#allocation7 + $0x14]]
        %v2097 = vstv %s2096
        %v2098 = vmul.f32 %v2097, %v433
        %v2099 = vmul.f32 %v2097, %v434
        %v2100 = vmul.f32 %v2097, %v435
        %v2104 = vrot.slane %v2098, 2
        %v2105 = vrot.slane %v2099, 2
        %v2106 = vsel %vm473, %v2104, %v2105
        %v2107 = vrot.slane %v2100, 2
        %v2108 = vsel %vm473, %v2105, %v2107
        %2109 = vrot.lane.b32.xlu0 %v2106, 122
        %v2110 = vpop.permute.xlu0 %2109
        %2111 = vrot.lane.b32.xlu0 %v2108, 122
        %v2112 = vpop.permute.xlu0 %2111
        %v2115 = vadd.f32 %v2094, %v2110
        %v2116 = vadd.f32 %v2095, %v2112
        %s2117 = sld [smem:[#allocation7 + $0x1b]]
        %v2118 = vstv %s2117
        %v2119 = vmul.f32 %v2118, %v433
        %v2120 = vmul.f32 %v2118, %v434
        %v2121 = vmul.f32 %v2118, %v435
        %v2125 = vrot.slane %v2119, 3
        %v2126 = vrot.slane %v2120, 3
        %v2127 = vsel %vm491, %v2125, %v2126
        %v2128 = vrot.slane %v2121, 3
        %v2129 = vsel %vm491, %v2126, %v2128
        %2130 = vrot.lane.b32.xlu0 %v2127, 122
        %v2131 = vpop.permute.xlu0 %2130
        %2132 = vrot.lane.b32.xlu0 %v2129, 122
        %v2133 = vpop.permute.xlu0 %2132
        %v2136 = vadd.f32 %v2115, %v2131
        %v2137 = vadd.f32 %v2116, %v2133
        %s2138 = sld [smem:[#allocation7 + $0x22]]
        %v2139 = vstv %s2138
        %v2140 = vmul.f32 %v2139, %v433
        %v2141 = vmul.f32 %v2139, %v434
        %v2142 = vmul.f32 %v2139, %v435
        %v2146 = vrot.slane %v2140, 4
        %v2147 = vrot.slane %v2141, 4
        %v2148 = vsel %vm206, %v2146, %v2147
        %v2149 = vrot.slane %v2142, 4
        %v2150 = vsel %vm206, %v2147, %v2149
        %2151 = vrot.lane.b32.xlu0 %v2148, 122
        %v2152 = vpop.permute.xlu0 %2151
        %2153 = vrot.lane.b32.xlu0 %v2150, 122
        %v2154 = vpop.permute.xlu0 %2153
        %v2157 = vadd.f32 %v2136, %v2152
        %v2158 = vadd.f32 %v2137, %v2154
        %s2159 = sld [smem:[#allocation7 + $0x29]]
        %v2160 = vstv %s2159
        %v2161 = vmul.f32 %v2160, %v433
        %v2162 = vmul.f32 %v2160, %v434
        %v2163 = vmul.f32 %v2160, %v435
        %v2167 = vrot.slane %v2161, 5
        %v2168 = vrot.slane %v2162, 5
        %v2169 = vsel %vm388, %v2167, %v2168
        %v2170 = vrot.slane %v2163, 5
        %v2171 = vsel %vm388, %v2168, %v2170
        %2172 = vrot.lane.b32.xlu0 %v2169, 122
        %v2173 = vpop.permute.xlu0 %2172
        %2174 = vrot.lane.b32.xlu0 %v2171, 122
        %v2175 = vpop.permute.xlu0 %2174
        %v2178 = vadd.f32 %v2157, %v2173
        %v2179 = vadd.f32 %v2158, %v2175
        %s2180 = sld [smem:[#allocation7 + $0x30]]
        %v2181 = vstv %s2180
        %v2182 = vmul.f32 %v2181, %v433
        %v2183 = vmul.f32 %v2181, %v434
        %v2184 = vmul.f32 %v2181, %v435
        %v2188 = vrot.slane %v2182, 6
        %v2189 = vrot.slane %v2183, 6
        %v2190 = vsel %vm543, %v2188, %v2189
        %v2191 = vrot.slane %v2184, 6
        %v2192 = vsel %vm543, %v2189, %v2191
        %2193 = vrot.lane.b32.xlu0 %v2190, 122
        %v2194 = vpop.permute.xlu0 %2193
        %2195 = vrot.lane.b32.xlu0 %v2192, 122
        %v2196 = vpop.permute.xlu0 %2195
        %v2199 = vadd.f32 %v2178, %v2194
        %v2200 = vadd.f32 %v2179, %v2196
        %s2201 = sld [smem:[#allocation7 + $0x37]]
        %v2202 = vstv %s2201
        %v2203 = vmul.f32 %v2202, %v436
        %v2204 = vmul.f32 %v2202, %v437
        %2207 = vrot.lane.b32.xlu0 %v2203, 122
        %v2208 = vpop.permute.xlu0 %2207
        %2209 = vrot.lane.b32.xlu0 %v2204, 122
        %v2210 = vpop.permute.xlu0 %2209
        %v2213 = vadd.f32 %v2199, %v2208
        %v2214 = vadd.f32 %v2200, %v2210
        %s2215 = sld [smem:[#allocation7 + $0x3e]]
        %v2216 = vstv %s2215
        %v2217 = vmul.f32 %v2216, %v436
        %v2218 = vmul.f32 %v2216, %v437
        %v2219 = vmul.f32 %v2216, %v438
        %v2223 = vrot.slane %v2217, 1
        %v2224 = vrot.slane %v2218, 1
        %v2225 = vsel %vm455, %v2223, %v2224
        %v2226 = vrot.slane %v2219, 1
        %v2227 = vsel %vm455, %v2224, %v2226
        %2228 = vrot.lane.b32.xlu0 %v2225, 122
        %v2229 = vpop.permute.xlu0 %2228
        %2230 = vrot.lane.b32.xlu0 %v2227, 122
        %v2231 = vpop.permute.xlu0 %2230
        %v2234 = vadd.f32 %v2213, %v2229
        %v2235 = vadd.f32 %v2214, %v2231
        %s2236 = sld [smem:[#allocation7 + $0x45]]
        %v2237 = vstv %s2236
        %v2238 = vmul.f32 %v2237, %v436
        %v2239 = vmul.f32 %v2237, %v437
        %v2240 = vmul.f32 %v2237, %v438
        %v2244 = vrot.slane %v2238, 2
        %v2245 = vrot.slane %v2239, 2
        %v2246 = vsel %vm473, %v2244, %v2245
        %v2247 = vrot.slane %v2240, 2
        %v2248 = vsel %vm473, %v2245, %v2247
        %2249 = vrot.lane.b32.xlu0 %v2246, 122
        %v2250 = vpop.permute.xlu0 %2249
        %2251 = vrot.lane.b32.xlu0 %v2248, 122
        %v2252 = vpop.permute.xlu0 %2251
        %v2255 = vadd.f32 %v2234, %v2250
        %v2256 = vadd.f32 %v2235, %v2252
        %s2257 = sld [smem:[#allocation7 + $0x4c]]
        %v2258 = vstv %s2257
        %v2259 = vmul.f32 %v2258, %v436
        %v2260 = vmul.f32 %v2258, %v437
        %v2261 = vmul.f32 %v2258, %v438
        %v2265 = vrot.slane %v2259, 3
        %v2266 = vrot.slane %v2260, 3
        %v2267 = vsel %vm491, %v2265, %v2266
        %v2268 = vrot.slane %v2261, 3
        %v2269 = vsel %vm491, %v2266, %v2268
        %2270 = vrot.lane.b32.xlu0 %v2267, 122
        %v2271 = vpop.permute.xlu0 %2270
        %2272 = vrot.lane.b32.xlu0 %v2269, 122
        %v2273 = vpop.permute.xlu0 %2272
        %v2276 = vadd.f32 %v2255, %v2271
        %v2277 = vadd.f32 %v2256, %v2273
        %s2278 = sld [smem:[#allocation7 + $0x53]]
        %v2279 = vstv %s2278
        %v2280 = vmul.f32 %v2279, %v436
        %v2281 = vmul.f32 %v2279, %v437
        %v2282 = vmul.f32 %v2279, %v438
        %v2286 = vrot.slane %v2280, 4
        %v2287 = vrot.slane %v2281, 4
        %v2288 = vsel %vm206, %v2286, %v2287
        %v2289 = vrot.slane %v2282, 4
        %v2290 = vsel %vm206, %v2287, %v2289
        %2291 = vrot.lane.b32.xlu0 %v2288, 122
        %v2292 = vpop.permute.xlu0 %2291
        %2293 = vrot.lane.b32.xlu0 %v2290, 122
        %v2294 = vpop.permute.xlu0 %2293
        %v2297 = vadd.f32 %v2276, %v2292
        %v2298 = vadd.f32 %v2277, %v2294
        %s2299 = sld [smem:[#allocation7 + $0x5a]]
        %v2300 = vstv %s2299
        %v2301 = vmul.f32 %v2300, %v436
        %v2302 = vmul.f32 %v2300, %v437
        %v2303 = vmul.f32 %v2300, %v438
        %v2307 = vrot.slane %v2301, 5
        %v2308 = vrot.slane %v2302, 5
        %v2309 = vsel %vm388, %v2307, %v2308
        %v2310 = vrot.slane %v2303, 5
        %v2311 = vsel %vm388, %v2308, %v2310
        %2312 = vrot.lane.b32.xlu0 %v2309, 122
        %v2313 = vpop.permute.xlu0 %2312
        %2314 = vrot.lane.b32.xlu0 %v2311, 122
        %v2315 = vpop.permute.xlu0 %2314
        %v2318 = vadd.f32 %v2297, %v2313
        %v2319 = vadd.f32 %v2298, %v2315
        %s2320 = sld [smem:[#allocation7 + $0x61]]
        %v2321 = vstv %s2320
        %v2322 = vmul.f32 %v2321, %v436
        %v2323 = vmul.f32 %v2321, %v437
        %v2324 = vmul.f32 %v2321, %v438
        %v2328 = vrot.slane %v2322, 6
        %v2329 = vrot.slane %v2323, 6
        %v2330 = vsel %vm543, %v2328, %v2329
        %v2331 = vrot.slane %v2324, 6
        %v2332 = vsel %vm543, %v2329, %v2331
        %2333 = vrot.lane.b32.xlu0 %v2330, 122
        %v2334 = vpop.permute.xlu0 %2333
        %2335 = vrot.lane.b32.xlu0 %v2332, 122
        %v2336 = vpop.permute.xlu0 %2335
        %v2339 = vadd.f32 %v2318, %v2334
        %v2340 = vadd.f32 %v2319, %v2336
        %v2341 = vsub.f32 0.0, %v2339
        %v2342 = vsub.f32 0.0, %v2340
        %v2343 = vmul.f32 %v2341, 1.442695
        %v2344 = vpow.pop %v2343
        %v2345 = vmul.f32 %v2342, 1.442695
        %v2346 = vpow.pop %v2345
        %v2347 = vadd.f32 %v2344, 1.0
        %v2348 = vadd.f32 %v2346, 1.0
        %v2349 = vrcp.pop %v2347
        %v2350 = vmul.f32 1.0, %v2349
        %v2351 = vrcp.pop %v2348
        %v2352 = vmul.f32 1.0, %v2351
        %v2353 = vcombine.high %v2350, 0.0
        %v2355 = vunpack.c.l.s4 1983009808
        %v2356 = vunpack.c.0.s8 %v2355
        %v2357 = vlaneseq
        %v2358 = vshrl.u32 %v2357, 7
        %v2359 = vsub.s32 %v2356, %v2358
        %v2360 = vrot.slane %v2350, %v2359
        %v2362 = vunpack.c.l.s4 1983009808
        %v2363 = vunpack.c.0.s8 %v2362
        %v2364 = vlaneseq
        %v2365 = vshrl.u32 %v2364, 7
        %v2366 = vsub.s32 %v2363, %v2365
        %v2367 = vrot.slane %v2353, %v2366
        %v2368 = vcombine.high %v2360, 0.0
        %v2370 = vunpack.c.l.s4 1934713408
        %v2371 = vunpack.c.0.s8 %v2370
        %v2372 = vlaneseq
        %v2373 = vshrl.u32 %v2372, 7
        %v2374 = vsub.s32 %v2371, %v2373
        %v2375 = vrot.slane %v2360, %v2374
        %v2377 = vunpack.c.l.s4 1934713408
        %v2378 = vunpack.c.0.s8 %v2377
        %v2379 = vlaneseq
        %v2380 = vshrl.u32 %v2379, 7
        %v2381 = vsub.s32 %v2378, %v2380
        %v2382 = vrot.slane %v2368, %v2381
        %v2383 = vcombine.high %v2367, 0.0
        %v2385 = vunpack.c.l.s4 1934713408
        %v2386 = vunpack.c.0.s8 %v2385
        %v2387 = vlaneseq
        %v2388 = vshrl.u32 %v2387, 7
        %v2389 = vsub.s32 %v2386, %v2388
        %v2390 = vrot.slane %v2367, %v2389
        %v2392 = vunpack.c.l.s4 1934713408
        %v2393 = vunpack.c.0.s8 %v2392
        %v2394 = vlaneseq
        %v2395 = vshrl.u32 %v2394, 7
        %v2396 = vsub.s32 %v2393, %v2395
        %v2397 = vrot.slane %v2383, %v2396
        %v2398 = vcombine.high %v2375, 0.0
        %v2399 = vcombine.high %v2382, 0.0
        %v2400 = vcombine.high %v2390, 0.0
        %v2401 = vcombine.high %v2397, 0.0
        %v2402 = vcombine.high %v2352, 0.0
        %v2404 = vunpack.c.l.s4 1983009808
        %v2405 = vunpack.c.0.s8 %v2404
        %v2406 = vlaneseq
        %v2407 = vshrl.u32 %v2406, 7
        %v2408 = vsub.s32 %v2405, %v2407
        %v2409 = vrot.slane %v2352, %v2408
        %v2411 = vunpack.c.l.s4 1983009808
        %v2412 = vunpack.c.0.s8 %v2411
        %v2413 = vlaneseq
        %v2414 = vshrl.u32 %v2413, 7
        %v2415 = vsub.s32 %v2412, %v2414
        %v2416 = vrot.slane %v2402, %v2415
        %v2417 = vcombine.high %v2409, 0.0
        %v2419 = vunpack.c.l.s4 1934713408
        %v2420 = vunpack.c.0.s8 %v2419
        %v2421 = vlaneseq
        %v2422 = vshrl.u32 %v2421, 7
        %v2423 = vsub.s32 %v2420, %v2422
        %v2424 = vrot.slane %v2409, %v2423
        %v2426 = vunpack.c.l.s4 1934713408
        %v2427 = vunpack.c.0.s8 %v2426
        %v2428 = vlaneseq
        %v2429 = vshrl.u32 %v2428, 7
        %v2430 = vsub.s32 %v2427, %v2429
        %v2431 = vrot.slane %v2417, %v2430
        %v2432 = vcombine.high %v2416, 0.0
        %v2434 = vunpack.c.l.s4 1934713408
        %v2435 = vunpack.c.0.s8 %v2434
        %v2436 = vlaneseq
        %v2437 = vshrl.u32 %v2436, 7
        %v2438 = vsub.s32 %v2435, %v2437
        %v2439 = vrot.slane %v2416, %v2438
        %v2441 = vunpack.c.l.s4 1934713408
        %v2442 = vunpack.c.0.s8 %v2441
        %v2443 = vlaneseq
        %v2444 = vshrl.u32 %v2443, 7
        %v2445 = vsub.s32 %v2442, %v2444
        %v2446 = vrot.slane %v2432, %v2445
        %v2447 = vcombine.high %v2424, 0.0
        %v2448 = vcombine.high %v2431, 0.0
        %v2449 = vcombine.high %v2439, 0.0
        %v2450 = vcombine.high %v2446, 0.0
        %2452 = vrot.lane.b32.xlu0 %v2398, 16
        %v2453 = vpop.permute.xlu0 %2452
        %2456 = vrot.lane.b32.xlu0 %v2382, 32
        %v2457 = vpop.permute.xlu0 %2456
        %2460 = vrot.lane.b32.xlu0 %v2399, 48
        %v2461 = vpop.permute.xlu0 %2460
        %2464 = vrot.lane.b32.xlu0 %v2390, 64
        %v2465 = vpop.permute.xlu0 %2464
        %2468 = vrot.lane.b32.xlu0 %v2400, 80
        %v2469 = vpop.permute.xlu0 %2468
        %2472 = vrot.lane.b32.xlu0 %v2397, 96
        %v2473 = vpop.permute.xlu0 %2472
        %2476 = vrot.lane.b32.xlu0 %v2401, 112
        %v2477 = vpop.permute.xlu0 %2476
        %2480 = vrot.lane.b32.xlu0 %v2447, 16
        %v2481 = vpop.permute.xlu0 %2480
        %2484 = vrot.lane.b32.xlu0 %v2431, 32
        %v2485 = vpop.permute.xlu0 %2484
        %2488 = vrot.lane.b32.xlu0 %v2448, 48
        %v2489 = vpop.permute.xlu0 %2488
        %2492 = vrot.lane.b32.xlu0 %v2439, 64
        %v2493 = vpop.permute.xlu0 %2492
        %2496 = vrot.lane.b32.xlu0 %v2449, 80
        %v2497 = vpop.permute.xlu0 %2496
        %2500 = vrot.lane.b32.xlu0 %v2446, 96
        %v2501 = vpop.permute.xlu0 %2500
        %2504 = vrot.lane.b32.xlu0 %v2450, 112
        %v2505 = vpop.permute.xlu0 %2504
        %vm2507 = vcmask 130048
        %v2508 = vsel %vm2507, %v2375, %v2453
        %vm2509 = vcmask 261120
        %v2510 = vsel %vm2509, %v2508, %v2457
        %vm2511 = vcmask 392192
        %v2512 = vsel %vm2511, %v2510, %v2461
        %vm2513 = vcmask 523264
        %v2514 = vsel %vm2513, %v2512, %v2465
        %vm2515 = vcmask 654336
        %v2516 = vsel %vm2515, %v2514, %v2469
        %vm2517 = vcmask 785408
        %v2518 = vsel %vm2517, %v2516, %v2473
        %vm2519 = vcmask 916480
        %v2520 = vsel %vm2519, %v2518, %v2477
        %v2521 = vsel %vm2507, %v2424, %v2481
        %v2522 = vsel %vm2509, %v2521, %v2485
        %v2523 = vsel %vm2511, %v2522, %v2489
        %v2524 = vsel %vm2513, %v2523, %v2493
        %v2525 = vsel %vm2515, %v2524, %v2497
        %v2526 = vsel %vm2517, %v2525, %v2501
        %v2527 = vsel %vm2519, %v2526, %v2505
        %v2528 = vlaneseq
        %v2529 = vshrl.u32 %v2528, 7
        %v2530 = vsub.s32 0, %v2529
        %v2531 = vrot.slane %v2520, %v2530
        %v2532 = vlaneseq
        %v2533 = vshrl.u32 %v2532, 7
        %v2534 = vsub.s32 0, %v2533
        %v2535 = vrot.slane %v2527, %v2534
        %v2538 = vcombine.low %v2531, %v2535
        %v2540 = vmul.f32 %v202, %v2538
        %2541 = vst [vmem:[%s201] sm:$0xff] %v2540
        %s2542 = sand.u32 %s98, 1
        %s2543 = scalar_lea.sflag [#allocation5], %s2542
        %s2544 = sand.u32 %s98, 1
        %s2545 = smul.addr %s2544, 8
        %s2546 = scalar_lea.vmem [#allocation8], %s2545
        // Predicated region
        $region41: #{tpu_custom_call.1} parent=31 // pred_check
          %p2547 = pneg %p108
        $region42: #{tpu_custom_call.1} parent=31 // pred_check_branch
          %2549 = sbr.rel (%p2547) target = $region44
        $region43: #{tpu_custom_call.1} parent=31 // pred_region
          %s2551 = ssub.s32 128, 128
          %2552 = vsyncadd %s2543, %s2551
          %s2553 = smul.addr %s22, 2
          %s2554 = smul.addr %s2553, 64
          %s2555 = scalar_lea.hbm %s3, %s2554
          %s2557 = sshll.u32 %s2546, 4
          %s2558 = int_to_ptr.vmem [resolvable:$true] %s2557
          %2560 = dma.vmem_to_hbm [thread:$0]  %s2558, 128, %s2555, %s2543
        $region44: #{tpu_custom_call.1} parent=31 // pred_fallthru
          _
      $region32: #{tpu_custom_call.1} parent=5 // pred_fallthru
        _
      %p2561 = scmp.le.s32.totalorder 2, %s17
      // Predicated region
      $region45: #{tpu_custom_call.1} parent=5 // pred_check
        %p2562 = pneg %p2561
      $region46: #{tpu_custom_call.1} parent=5 // pred_check_branch
        %2564 = sbr.rel (%p2562) target = $region48
      $region47: #{tpu_custom_call.1} parent=5 // pred_region
        %s2565 = ssub.s32 %s17, 2
        // Predicated region
        $region49: #{tpu_custom_call.1} parent=47 // pred_check
          %p2566 = pneg %p114
        $region50: #{tpu_custom_call.1} parent=47 // pred_check_branch
          %2568 = sbr.rel (%p2566) target = $region52
        $region51: #{tpu_custom_call.1} parent=47 // pred_region
          %s2569 = sand.u32 %s99, 1
          %s2570 = scalar_lea.sflag [#allocation5], %s2569
          %s2571 = sand.u32 %s99, 1
          %s2572 = smul.addr %s2571, 8
          %s2573 = scalar_lea.vmem [#allocation8], %s2572
          %2574 = dma.done %s2570, 128
        $region52: #{tpu_custom_call.1} parent=47 // pred_fallthru
          _
      $region48: #{tpu_custom_call.1} parent=5 // pred_fallthru
        _
    $region6: #{tpu_custom_call.1} parent=1 // loop_footer
      %s21 = sadd.s32 1, %s17
    $region7: #{tpu_custom_call.1} parent=1 // loop_footer_branch
      %16 = sbr.rel target = $region3
    $region8: #{tpu_custom_call.1} parent=1 // loop_exit
      _
    %2575 = vsyncpa [#allocation4], 1
    %s2576 = scalar_lea.sflag [#allocation4], 1
    %2577 = vsyncpa %s2576, 1
    %2578 = vsyncpa [#allocation5], 1
    %s2579 = scalar_lea.sflag [#allocation5], 1
    %2580 = vsyncpa %s2579, 1
    %2581 = vsyncpa [#allocation6], 1
    %s2582 = scalar_lea.sflag [#allocation6], 1
    %2583 = vsyncpa %s2582, 1

</llo_original>
